<compile_context>
chip_gen: v6e
topology: v6e:2x2x1
jax: 0.10.0
libtpu: 0.0.40
codegen_flags: <defaults>
</compile_context>

<pallas_src>
import jax
import jax.numpy as jnp
from jax.experimental import pallas as pl
from jax.experimental.pallas import tpu as pltpu


def control_unit_kernel(
    q_ref,      # [TB, 2D]   question tile
    ctrl_ref,   # [TB, D]    previous control tile
    ctx_ref,    # [TB, S, D] context tile (native dtype)
    verb_ref,   # [TB, D]
    w_pa_ref,   # [2D, D]    position_aware[step] weight (transposed), resident
    b_pa_ref,   # [1, D]
    w_cq_ref,   # [2D, D]    control_question weight (transposed, attn-folded)
    b_cq_ref,   # [1, D]     (attn-folded)
    out_ref,    # [TB, D]
):
    q = q_ref[...].astype(jnp.float32)
    ctrl = ctrl_ref[...].astype(jnp.float32)
    verb = verb_ref[...].astype(jnp.float32)
    ctx = ctx_ref[...]                      # keep native dtype; promote at use

    D = ctrl.shape[-1]

    # position_aware = Linear(2D -> D)(question)                        (MXU)
    pa = jnp.dot(q, w_pa_ref[...], preferred_element_type=jnp.float32) + b_pa_ref[...]

    # control_question = Linear(2D -> D)(cat([control, position_aware], 1))
    # with the attn weight pre-folded into w_cq / b_cq (wrapper), so `cqw`
    # already carries the per-feature attention scaling.                 (MXU)
    w_cq = w_cq_ref[...]
    cqw = (
        jnp.dot(ctrl, w_cq[:D, :], preferred_element_type=jnp.float32)
        + jnp.dot(pa, w_cq[D:, :], preferred_element_type=jnp.float32)
        + b_cq_ref[...]
    )  # [TB, D]

    # attention logits: VPU multiply + lane (XLU) reduce, f32 accumulate.
    # (b_attn dropped: a constant shift is a softmax no-op.)
    logits = jnp.sum(ctx * cqw[:, None, :], axis=-1)        # [TB, S]

    # exact softmax over the sequence axis
    m = jnp.max(logits, axis=-1, keepdims=True)
    e = jnp.exp(logits - m)
    attn = e / jnp.sum(e, axis=-1, keepdims=True)           # [TB, S]

    # attended context: VPU multiply + sublane reduce.
    nxt = jnp.sum(attn[:, :, None] * ctx, axis=1)           # [TB, D]

    out_ref[...] = (nxt * verb).astype(out_ref.dtype)


def _vmem_capacity_bytes():
    try:
        return int(pltpu.get_tpu_info().vmem_capacity_bytes)
    except Exception:
        return 128 << 20  # v5e / v6e default


def _pick_batch_tile(B, S, D, ctx_itemsize, budget_bytes):
    """Largest batch tile (multiple of 8, or == B) whose double-buffered
    context block fits `budget_bytes`; prefer >= 2 tiles so the "parallel"
    batch axis can shard across 2 TensorCores on v7x."""
    per_row = max(1, 2 * S * D * ctx_itemsize)   # double-buffered ctx rows
    tb = (budget_bytes // per_row) // 8 * 8
    # Floor of 8; a flash-style S-tiled path would be needed for rows so large
    # that even TB=8 exceeds the budget (not implemented here).
    tb = max(8, tb)
    tb = min(tb, B)
    if tb >= B and B >= 16:                      # keep >= 2 tiles for megacore
        tb = min(B, max(8, ((pl.cdiv(B, 2) + 7) // 8) * 8))
    return tb


def control_unit_forward(step, context, question, control, verb, params):
    B, S, D = context.shape
    cap = _vmem_capacity_bytes()
    ctx_budget = min(cap // 4, 32 << 20)         # ~16 MiB on 64 MiB parts
    TB = _pick_batch_tile(B, S, D, context.dtype.itemsize, ctx_budget)
    nb = pl.cdiv(B, TB)

    # Per-step weight: `step` is a Python int in the MAC unroll -> static slice.
    w_pa = params["w_pa"][step]                  # [2D, D]
    b_pa = params["b_pa"][step]                  # [1, D]

    # Fold the attn weight into control_question's weight/bias (exact).
    w_attn = params["w_attn"]                    # [1, D]
    w_cq = params["w_cq"] * w_attn               # [2D, D], columns scaled
    b_cq = params["b_cq"] * w_attn               # [1, D]

    # VMEM requirement of the chosen tiling (double-buffered pipeline).
    need = 2 * TB * S * D * context.dtype.itemsize
    need += 2 * TB * 2 * D * question.dtype.itemsize
    need += 2 * TB * D * (control.dtype.itemsize + verb.dtype.itemsize + 4)
    need += 2 * (2 * (2 * D * D) + 2 * D) * 4    # resident weights + biases
    vmem_limit = int(max(16 << 20, min(int(cap * 0.6), 4 * need)))

    grid_spec = pl.GridSpec(
        grid=(nb,),
        in_specs=[
            pl.BlockSpec((TB, 2 * D), lambda i: (i, 0)),      # question
            pl.BlockSpec((TB, D), lambda i: (i, 0)),          # control
            pl.BlockSpec((TB, S, D), lambda i: (i, 0, 0)),    # context
            pl.BlockSpec((TB, D), lambda i: (i, 0)),          # verb
            pl.BlockSpec((2 * D, D), lambda i: (0, 0)),       # w_pa[step] (resident)
            pl.BlockSpec((1, D), lambda i: (0, 0)),           # b_pa[step]
            pl.BlockSpec((2 * D, D), lambda i: (0, 0)),       # w_cq (attn-folded)
            pl.BlockSpec((1, D), lambda i: (0, 0)),           # b_cq (attn-folded)
        ],
        out_specs=pl.BlockSpec((TB, D), lambda i: (i, 0)),
    )

    return pl.pallas_call(
        control_unit_kernel,
        out_shape=jax.ShapeDtypeStruct((B, D), jnp.float32),
        grid_spec=grid_spec,
        compiler_params=pltpu.CompilerParams(
            dimension_semantics=("parallel",),
            vmem_limit_bytes=vmem_limit,
        ),
    )(question, control, context, verb, w_pa, b_pa, w_cq, b_cq)


# ----------------------------- parameter init -----------------------------

def xavier_uniform(key, shape_torch):
    """shape_torch = (out_dim, in_dim) as in nn.Linear; returns transposed
    [in_dim, out_dim] weight for x @ W usage."""
    out_dim, in_dim = shape_torch
    bound = (6.0 / (in_dim + out_dim)) ** 0.5
    w = jax.random.uniform(key, (out_dim, in_dim), jnp.float32, -bound, bound)
    return w.T  # [in_dim, out_dim]


def init_params(key, dim, max_step):
    keys = jax.random.split(key, max_step + 2)
    w_pa = jnp.stack(
        [xavier_uniform(keys[i], (dim, 2 * dim)) for i in range(max_step)], axis=0
    )                                                   # [max_step, 2D, D]
    b_pa = jnp.zeros((max_step, 1, dim), jnp.float32)   # zeros, as in module
    w_cq = xavier_uniform(keys[max_step], (dim, 2 * dim))     # [2D, D]
    b_cq = jnp.zeros((1, dim), jnp.float32)
    w_attn_t = xavier_uniform(keys[max_step + 1], (1, dim))   # [D, 1]
    w_attn = w_attn_t.T                                       # [1, D] row vector
    b_attn = jnp.zeros((1, 1), jnp.float32)                   # no-op under softmax
    return dict(w_pa=w_pa, b_pa=b_pa, w_cq=w_cq, b_cq=b_cq,
                w_attn=w_attn, b_attn=b_attn)


# ------------------------------ pure-JAX ref -------------------------------

def reference(step, context, question, control, verb, params):
    w_pa, b_pa = params["w_pa"][step], params["b_pa"][step]
    pa = question @ w_pa + b_pa
    cq_in = jnp.concatenate([control, pa], axis=1)
    cq = cq_in @ params["w_cq"] + params["b_cq"]
    ctx_prod = cq[:, None, :] * context
    logits = ctx_prod @ params["w_attn"].T + params["b_attn"][0, 0]  # [B,S,1]
    attn = jax.nn.softmax(logits, axis=1)
    nxt = jnp.sum(attn * context, axis=1)
    return nxt * verb


if __name__ == "__main__":
    # Exact f32 matmuls everywhere (PyTorch nn.Linear is exact f32); keeps the
    # reference's XLA matmuls and the kernel's MXU matmuls rounding-identical.
    jax.config.update("jax_default_matmul_precision", "highest")

    B, S, D, MAX_STEP = 2, 8, 32, 4
    key = jax.random.PRNGKey(0)
    k_ctx, k_q, k_ctrl, k_verb, k_param = jax.random.split(key, 5)

    context = jax.random.normal(k_ctx, (B, S, D), jnp.float32)
    question = jax.random.normal(k_q, (B, 2 * D), jnp.float32)
    control = jax.random.normal(k_ctrl, (B, D), jnp.float32)
    verb = jax.random.normal(k_verb, (B, D), jnp.float32)
    params = init_params(k_param, D, MAX_STEP)

    step = 1
    out = control_unit_forward(step, context, question, control, verb, params)
    out = jax.block_until_ready(out)

    ref = reference(step, context, question, control, verb, params)
    assert out.shape == (B, D)
    assert jnp.allclose(out, ref, atol=2e-3, rtol=2e-3), "mismatch vs reference"

    print("KERNEL_OK")
</pallas_src>

<mosaic_0001>
module attributes {stable_mosaic.version = 11 : i64} {
  func.func @control_unit_kernel(%arg0: i32, %arg1: memref<2x64xf32, #tpu.memory_space<vmem>>, %arg2: memref<2x32xf32, #tpu.memory_space<vmem>>, %arg3: memref<2x8x32xf32, #tpu.memory_space<vmem>>, %arg4: memref<2x32xf32, #tpu.memory_space<vmem>>, %arg5: memref<64x32xf32, #tpu.memory_space<vmem>>, %arg6: memref<1x32xf32, #tpu.memory_space<vmem>>, %arg7: memref<64x32xf32, #tpu.memory_space<vmem>>, %arg8: memref<1x32xf32, #tpu.memory_space<vmem>>, %arg9: memref<2x32xf32, #tpu.memory_space<vmem>>) attributes {dimension_semantics = [#tpu.dimension_semantics<parallel>], iteration_bounds = array<i64: 1>, scalar_prefetch = 0 : i64, scratch_operands = 0 : i64, tpu.core_type = #tpu.core_type<tc>, window_params = [{transform_indices = @transform_0, window_bounds = array<i64: 2, 64>}, {transform_indices = @transform_1, window_bounds = array<i64: 2, 32>}, {transform_indices = @transform_2, window_bounds = array<i64: 2, 8, 32>}, {transform_indices = @transform_3, window_bounds = array<i64: 2, 32>}, {pipeline_mode = #tpu.pipeline_mode<synchronous>, transform_indices = @transform_4, window_bounds = array<i64: 64, 32>}, {pipeline_mode = #tpu.pipeline_mode<synchronous>, transform_indices = @transform_5, window_bounds = array<i64: 1, 32>}, {pipeline_mode = #tpu.pipeline_mode<synchronous>, transform_indices = @transform_6, window_bounds = array<i64: 64, 32>}, {pipeline_mode = #tpu.pipeline_mode<synchronous>, transform_indices = @transform_7, window_bounds = array<i64: 1, 32>}, {transform_indices = @transform_8, window_bounds = array<i64: 2, 32>}]} {
    %c0 = arith.constant 0 : index
    %c0_0 = arith.constant 0 : index
    %0 = vector.load %arg1[%c0, %c0_0] : memref<2x64xf32, #tpu.memory_space<vmem>>, vector<2x64xf32>
    %c0_1 = arith.constant 0 : index
    %c0_2 = arith.constant 0 : index
    %1 = vector.load %arg2[%c0_1, %c0_2] : memref<2x32xf32, #tpu.memory_space<vmem>>, vector<2x32xf32>
    %c0_3 = arith.constant 0 : index
    %c0_4 = arith.constant 0 : index
    %2 = vector.load %arg4[%c0_3, %c0_4] : memref<2x32xf32, #tpu.memory_space<vmem>>, vector<2x32xf32>
    %c0_5 = arith.constant 0 : index
    %c0_6 = arith.constant 0 : index
    %c0_7 = arith.constant 0 : index
    %3 = vector.load %arg3[%c0_5, %c0_6, %c0_7] : memref<2x8x32xf32, #tpu.memory_space<vmem>>, vector<2x8x32xf32>
    %c0_8 = arith.constant 0 : index
    %c0_9 = arith.constant 0 : index
    %4 = vector.load %arg5[%c0_8, %c0_9] : memref<64x32xf32, #tpu.memory_space<vmem>>, vector<64x32xf32>
    %cst = arith.constant dense<0.000000e+00> : vector<2x32xf32>
    %5 = tpu.matmul %0, %4, %cst {dimension_numbers = #tpu.dot_dimension_numbers<[1], [0], [0], [1], [0, 0, 1, 1], [], []>, precision = #tpu.contract_precision<fp32>} : vector<2x64xf32>, vector<64x32xf32>, vector<2x32xf32> -> vector<2x32xf32>
    %c0_10 = arith.constant 0 : index
    %c0_11 = arith.constant 0 : index
    %6 = vector.load %arg6[%c0_10, %c0_11] : memref<1x32xf32, #tpu.memory_space<vmem>>, vector<1x32xf32>
    %7 = vector.broadcast %6 : vector<1x32xf32> to vector<2x32xf32>
    %8 = arith.addf %5, %7 : vector<2x32xf32>
    %c0_12 = arith.constant 0 : index
    %c0_13 = arith.constant 0 : index
    %9 = vector.load %arg7[%c0_12, %c0_13] : memref<64x32xf32, #tpu.memory_space<vmem>>, vector<64x32xf32>
    %10 = vector.extract_strided_slice %9 {offsets = [0, 0], sizes = [32, 32], strides = [1, 1]} : vector<64x32xf32> to vector<32x32xf32>
    %cst_14 = arith.constant dense<0.000000e+00> : vector<2x32xf32>
    %11 = tpu.matmul %1, %10, %cst_14 {dimension_numbers = #tpu.dot_dimension_numbers<[1], [0], [0], [1], [0, 0, 1, 1], [], []>, precision = #tpu.contract_precision<fp32>} : vector<2x32xf32>, vector<32x32xf32>, vector<2x32xf32> -> vector<2x32xf32>
    %12 = vector.extract_strided_slice %9 {offsets = [32, 0], sizes = [32, 32], strides = [1, 1]} : vector<64x32xf32> to vector<32x32xf32>
    %cst_15 = arith.constant dense<0.000000e+00> : vector<2x32xf32>
    %13 = tpu.matmul %8, %12, %cst_15 {dimension_numbers = #tpu.dot_dimension_numbers<[1], [0], [0], [1], [0, 0, 1, 1], [], []>, precision = #tpu.contract_precision<fp32>} : vector<2x32xf32>, vector<32x32xf32>, vector<2x32xf32> -> vector<2x32xf32>
    %14 = arith.addf %11, %13 : vector<2x32xf32>
    %c0_16 = arith.constant 0 : index
    %c0_17 = arith.constant 0 : index
    %15 = vector.load %arg8[%c0_16, %c0_17] : memref<1x32xf32, #tpu.memory_space<vmem>>, vector<1x32xf32>
    %16 = vector.broadcast %15 : vector<1x32xf32> to vector<2x32xf32>
    %17 = arith.addf %14, %16 : vector<2x32xf32>
    %18 = vector.shape_cast %17 : vector<2x32xf32> to vector<2x1x32xf32>
    %19 = vector.broadcast %18 : vector<2x1x32xf32> to vector<2x8x32xf32>
    %20 = arith.mulf %3, %19 : vector<2x8x32xf32>
    %cst_18 = arith.constant dense<0.000000e+00> : vector<2x8xf32>
    %21 = vector.multi_reduction <add>, %20, %cst_18 [2] : vector<2x8x32xf32> to vector<2x8xf32>
    %cst_19 = arith.constant dense<0xFF800000> : vector<2xf32>
    %22 = vector.multi_reduction <maximumf>, %21, %cst_19 [1] : vector<2x8xf32> to vector<2xf32>
    %23 = vector.shape_cast %22 : vector<2xf32> to vector<2x1xf32>
    %24 = vector.broadcast %23 : vector<2x1xf32> to vector<2x8xf32>
    %25 = arith.subf %21, %24 : vector<2x8xf32>
    %26 = math.exp %25 : vector<2x8xf32>
    %cst_20 = arith.constant dense<0.000000e+00> : vector<2xf32>
    %27 = vector.multi_reduction <add>, %26, %cst_20 [1] : vector<2x8xf32> to vector<2xf32>
    %28 = vector.shape_cast %27 : vector<2xf32> to vector<2x1xf32>
    %29 = vector.broadcast %28 : vector<2x1xf32> to vector<2x8xf32>
    %30 = arith.divf %26, %29 : vector<2x8xf32>
    %31 = vector.shape_cast %30 : vector<2x8xf32> to vector<2x8x1xf32>
    %32 = vector.broadcast %31 : vector<2x8x1xf32> to vector<2x8x32xf32>
    %33 = arith.mulf %32, %3 : vector<2x8x32xf32>
    %cst_21 = arith.constant dense<0.000000e+00> : vector<2x32xf32>
    %34 = vector.multi_reduction <add>, %33, %cst_21 [1] : vector<2x8x32xf32> to vector<2x32xf32>
    %35 = arith.mulf %34, %2 : vector<2x32xf32>
    %c0_22 = arith.constant 0 : index
    %c0_23 = arith.constant 0 : index
    %36 = vector.load %arg9[%c0_22, %c0_23] : memref<2x32xf32, #tpu.memory_space<vmem>>, vector<2x32xf32>
    tpu.vector_store %arg9[%c0_22, %c0_23], %35 {strides = array<i32>} : memref<2x32xf32, #tpu.memory_space<vmem>>, vector<2x32xf32>,
    return
  }
  func.func @transform_0(%arg0: i32) -> (i32, i32) {
    %c0_i32 = arith.constant 0 : i32
    %c0_i32_0 = arith.constant 0 : i32
    return %arg0, %c0_i32 : i32, i32
  }
  func.func @transform_1(%arg0: i32) -> (i32, i32) {
    %c0_i32 = arith.constant 0 : i32
    %c0_i32_0 = arith.constant 0 : i32
    return %arg0, %c0_i32 : i32, i32
  }
  func.func @transform_2(%arg0: i32) -> (i32, i32, i32) {
    %c0_i32 = arith.constant 0 : i32
    %c0_i32_0 = arith.constant 0 : i32
    %c0_i32_1 = arith.constant 0 : i32
    return %arg0, %c0_i32, %c0_i32_0 : i32, i32, i32
  }
  func.func @transform_3(%arg0: i32) -> (i32, i32) {
    %c0_i32 = arith.constant 0 : i32
    %c0_i32_0 = arith.constant 0 : i32
    return %arg0, %c0_i32 : i32, i32
  }
  func.func @transform_4(%arg0: i32) -> (i32, i32) {
    %c0_i32 = arith.constant 0 : i32
    %c0_i32_0 = arith.constant 0 : i32
    %c0_i32_1 = arith.constant 0 : i32
    return %c0_i32, %c0_i32_0 : i32, i32
  }
  func.func @transform_5(%arg0: i32) -> (i32, i32) {
    %c0_i32 = arith.constant 0 : i32
    %c0_i32_0 = arith.constant 0 : i32
    %c0_i32_1 = arith.constant 0 : i32
    return %c0_i32, %c0_i32_0 : i32, i32
  }
  func.func @transform_6(%arg0: i32) -> (i32, i32) {
    %c0_i32 = arith.constant 0 : i32
    %c0_i32_0 = arith.constant 0 : i32
    %c0_i32_1 = arith.constant 0 : i32
    return %c0_i32, %c0_i32_0 : i32, i32
  }
  func.func @transform_7(%arg0: i32) -> (i32, i32) {
    %c0_i32 = arith.constant 0 : i32
    %c0_i32_0 = arith.constant 0 : i32
    %c0_i32_1 = arith.constant 0 : i32
    return %c0_i32, %c0_i32_0 : i32, i32
  }
  func.func @transform_8(%arg0: i32) -> (i32, i32) {
    %c0_i32 = arith.constant 0 : i32
    %c0_i32_0 = arith.constant 0 : i32
    return %arg0, %c0_i32 : i32, i32
  }
}

</mosaic_0001>

<llo_original>
// kernel: tpu_custom_call.1
$region0: #{tpu_custom_call.1}
  #allocation0 [shape = 'u32[]', space=smem, size = 0x4, offset = 0x4, fixed_abs, tag = 'smem constant byte address 0x4 - core index']
  #allocation1 [shape = 'u32[144,128]{1,0:T(1,128)}', space=vmem, size = 0x12000, scoped, tag = 'internal scratch']
  %s0 = inlined_call_operand.vmem [shape: f32[2,64], index: 0, kind: input, shape index: {}]
  %s1 = inlined_call_operand.vmem [shape: f32[2,32], index: 1, kind: input, shape index: {}]
  %s2 = inlined_call_operand.vmem [shape: f32[2,8,32], index: 2, kind: input, shape index: {}]
  %s3 = inlined_call_operand.vmem [shape: f32[2,32], index: 3, kind: input, shape index: {}]
  %s4 = inlined_call_operand.vmem [shape: f32[64,32], index: 4, kind: input, shape index: {}]
  %s5 = inlined_call_operand.vmem [shape: f32[1,32], index: 5, kind: input, shape index: {}]
  %s6 = inlined_call_operand.vmem [shape: f32[64,32], index: 6, kind: input, shape index: {}]
  %s7 = inlined_call_operand.vmem [shape: f32[1,32], index: 7, kind: input, shape index: {}]
  %s8 = inlined_call_operand.hbm [shape: f32[2,32], index: 8, kind: output, shape index: {}]
  %s9 = sld [smem:[#allocation0]]
  $region42: #{tpu_custom_call.1} parent=0
    _
  %s11 = ssub.s32 1, %s9
  %s12 = scalar_select 0, %s11, %s9
  $region1: #{tpu_custom_call.1} parent=0
    #allocation2 [shape = 'u8[1024]{0}', space=vmem, size = 0x400, scoped, tag = 'output window, operand 0, single buffered']
    #allocation3 [shape = 's32[1]{0}', space=sflag, size = 0x4, scoped, tag = 'scoped memory for tpu_custom_call.1']
    %13 = vsyncpa [#allocation3], 0
    // Predicated region
    $region2: #{tpu_custom_call.1} parent=1 // pred_check
      _
    $region3: #{tpu_custom_call.1} parent=1 // pred_check_branch
      %15 = sbr.rel (0) target = $region5
    $region4: #{tpu_custom_call.1} parent=1 // pred_region
      _
    $region5: #{tpu_custom_call.1} parent=1 // pred_fallthru
      _
    // Predicated region
    $region6: #{tpu_custom_call.1} parent=1 // pred_check
      _
    $region7: #{tpu_custom_call.1} parent=1 // pred_check_branch
      %17 = sbr.rel (0) target = $region9
    $region8: #{tpu_custom_call.1} parent=1 // pred_region
      _
    $region9: #{tpu_custom_call.1} parent=1 // pred_fallthru
      _
    // Predicated region
    $region10: #{tpu_custom_call.1} parent=1 // pred_check
      _
    $region11: #{tpu_custom_call.1} parent=1 // pred_check_branch
      %19 = sbr.rel (0) target = $region13
    $region12: #{tpu_custom_call.1} parent=1 // pred_region
      _
    $region13: #{tpu_custom_call.1} parent=1 // pred_fallthru
      _
    // Predicated region
    $region14: #{tpu_custom_call.1} parent=1 // pred_check
      _
    $region15: #{tpu_custom_call.1} parent=1 // pred_check_branch
      %21 = sbr.rel (0) target = $region17
    $region16: #{tpu_custom_call.1} parent=1 // pred_region
      _
    $region17: #{tpu_custom_call.1} parent=1 // pred_fallthru
      _
    // Predicated region
    $region18: #{tpu_custom_call.1} parent=1 // pred_check
      _
    $region19: #{tpu_custom_call.1} parent=1 // pred_check_branch
      %23 = sbr.rel (0) target = $region21
    $region20: #{tpu_custom_call.1} parent=1 // pred_region
      _
    $region21: #{tpu_custom_call.1} parent=1 // pred_fallthru
      _
    // Predicated region
    $region22: #{tpu_custom_call.1} parent=1 // pred_check
      _
    $region23: #{tpu_custom_call.1} parent=1 // pred_check_branch
      %25 = sbr.rel (0) target = $region25
    $region24: #{tpu_custom_call.1} parent=1 // pred_region
      _
    $region25: #{tpu_custom_call.1} parent=1 // pred_fallthru
      _
    // Predicated region
    $region26: #{tpu_custom_call.1} parent=1 // pred_check
      _
    $region27: #{tpu_custom_call.1} parent=1 // pred_check_branch
      %27 = sbr.rel (0) target = $region29
    $region28: #{tpu_custom_call.1} parent=1 // pred_region
      _
    $region29: #{tpu_custom_call.1} parent=1 // pred_fallthru
      _
    // Predicated region
    $region30: #{tpu_custom_call.1} parent=1 // pred_check
      _
    $region31: #{tpu_custom_call.1} parent=1 // pred_check_branch
      %29 = sbr.rel (0) target = $region33
    $region32: #{tpu_custom_call.1} parent=1 // pred_region
      _
    $region33: #{tpu_custom_call.1} parent=1 // pred_fallthru
      _
    %v30 = vld [vmem:[%s0] sm:$0x3]
    %v31 = vld [vmem:[%s1] sm:$0x3]
    %v32 = vld [vmem:[%s3] sm:$0x3]
    %v33 = vld [vmem:[%s2] sm:$0xff]
    %v34 = vld [vmem:[%s2 + $0x8] sm:$0xff]
    %v35 = vld [vmem:[%s4] sm:$0xff]
    %v36 = vld [vmem:[%s4 + $0x8] sm:$0xff]
    %v37 = vld [vmem:[%s4 + $0x10] sm:$0xff]
    %v38 = vld [vmem:[%s4 + $0x18] sm:$0xff]
    %v39 = vld [vmem:[%s4 + $0x20] sm:$0xff]
    %v40 = vld [vmem:[%s4 + $0x28] sm:$0xff]
    %v41 = vld [vmem:[%s4 + $0x30] sm:$0xff]
    %v42 = vld [vmem:[%s4 + $0x38] sm:$0xff]
    %v43 = vld [vmem:[%s5] sm:$0x1]
    %v45 = vlaneseq
    %v46 = vshrl.u32 %v45, 7
    %v47 = vsub.s32 0, %v46
    %v48 = vrot.slane %v43, %v47
    %vm50 = vcmask 523264
    %v52 = vsel %vm50, %v30, 0
    %54 = vmatprep.subr.mxu0 0.0
    %55 = vmatpush1.msra.mxu0 0.0
    %56 = vmatprep.subr.mxu0 0.0
    %57 = vmatpush1.msra.mxu0 0.0
    %58 = vmatprep.subr.mxu0 0.0
    %59 = vmatpush1.msra.mxu0 0.0
    %60 = vmatprep.subr.mxu0 0.0
    %61 = vmatpush1.msra.mxu0 0.0
    %62 = vmatprep.subr.mxu0 0.0
    %63 = vmatpush1.msra.mxu0 0.0
    %64 = vmatprep.subr.mxu0 0.0
    %65 = vmatpush1.msra.mxu0 0.0
    %66 = vmatprep.subr.mxu0 0.0
    %67 = vmatpush1.msra.mxu0 0.0
    %68 = vmatprep.subr.mxu0 0.0
    %69 = vmatpush1.msra.mxu0 0.0
    %70 = vmatprep.subr.mxu0 0.0
    %v71 = vand.u32 %v42, 4294901760
    %72 = vmatpush1.msra.mxu0 %v71
    %73 = vmatprep.subr.mxu0 0.0
    %v74 = vand.u32 %v41, 4294901760
    %75 = vmatpush1.msra.mxu0 %v74
    %76 = vmatprep.subr.mxu0 0.0
    %v77 = vand.u32 %v40, 4294901760
    %78 = vmatpush1.msra.mxu0 %v77
    %79 = vmatprep.subr.mxu0 0.0
    %v80 = vand.u32 %v39, 4294901760
    %81 = vmatpush1.msra.mxu0 %v80
    %82 = vmatprep.subr.mxu0 0.0
    %v83 = vand.u32 %v38, 4294901760
    %84 = vmatpush1.msra.mxu0 %v83
    %85 = vmatprep.subr.mxu0 0.0
    %v86 = vand.u32 %v37, 4294901760
    %87 = vmatpush1.msra.mxu0 %v86
    %88 = vmatprep.subr.mxu0 0.0
    %v89 = vand.u32 %v36, 4294901760
    %90 = vmatpush1.msra.mxu0 %v89
    %91 = vmatprep.subr.mxu0 0.0
    %v92 = vand.u32 %v35, 4294901760
    %93 = vmatpush1.msra.mxu0 %v92
    %94 = vmatprep.subr.mxu0 0.0
    %95 = vmatpush2.msra.mxu0 0.0
    %96 = vmatprep.subr.mxu0 0.0
    %97 = vmatpush2.msra.mxu0 0.0
    %98 = vmatprep.subr.mxu0 0.0
    %99 = vmatpush2.msra.mxu0 0.0
    %100 = vmatprep.subr.mxu0 0.0
    %101 = vmatpush2.msra.mxu0 0.0
    %102 = vmatprep.subr.mxu0 0.0
    %103 = vmatpush2.msra.mxu0 0.0
    %104 = vmatprep.subr.mxu0 0.0
    %105 = vmatpush2.msra.mxu0 0.0
    %106 = vmatprep.subr.mxu0 0.0
    %107 = vmatpush2.msra.mxu0 0.0
    %108 = vmatprep.subr.mxu0 0.0
    %109 = vmatpush2.msra.mxu0 0.0
    %110 = vmatprep.subr.mxu0 0.0
    %111 = vmatpush2.msra.mxu0 0.0
    %112 = vmatprep.subr.mxu0 0.0
    %113 = vmatpush2.msra.mxu0 0.0
    %114 = vmatprep.subr.mxu0 0.0
    %115 = vmatpush2.msra.mxu0 0.0
    %116 = vmatprep.subr.mxu0 0.0
    %117 = vmatpush2.msra.mxu0 0.0
    %118 = vmatprep.subr.mxu0 0.0
    %119 = vmatpush2.msra.mxu0 0.0
    %120 = vmatprep.subr.mxu0 0.0
    %121 = vmatpush2.msra.mxu0 0.0
    %122 = vmatprep.subr.mxu0 0.0
    %123 = vmatpush2.msra.mxu0 0.0
    %124 = vmatprep.subr.mxu0 0.0
    %125 = vmatpush2.msra.mxu0 0.0
    %126 = vmatprep.mubr.f32.mxu0 0.0
    %v127 = vand.u32 %v52, 4294901760
    %v128 = vsub.f32 %v52, %v127
    %v129 = vand.u32 %v128, 4294901760
    %v130 = vsub.f32 %v128, %v129
    %v131 = vand.u32 %v130, 4294901760
    %132 = vmatmul.mubr.f32.gmra.mxu0 %v131
    %v133 = vpop.f32.mrf.mxu0
    %v134 = vadd.f32 %v48, %v133
    %v135 = vpop.f32.mrf.mxu0
    %136 = vdwg.mxu0
    %137 = vmatprep.subr.mxu0 0.0
    %138 = vmatpush1.msra.mxu0 0.0
    %139 = vmatprep.subr.mxu0 0.0
    %140 = vmatpush1.msra.mxu0 0.0
    %141 = vmatprep.subr.mxu0 0.0
    %142 = vmatpush1.msra.mxu0 0.0
    %143 = vmatprep.subr.mxu0 0.0
    %144 = vmatpush1.msra.mxu0 0.0
    %145 = vmatprep.subr.mxu0 0.0
    %146 = vmatpush1.msra.mxu0 0.0
    %147 = vmatprep.subr.mxu0 0.0
    %148 = vmatpush1.msra.mxu0 0.0
    %149 = vmatprep.subr.mxu0 0.0
    %150 = vmatpush1.msra.mxu0 0.0
    %151 = vmatprep.subr.mxu0 0.0
    %152 = vmatpush1.msra.mxu0 0.0
    %153 = vmatprep.subr.mxu0 0.0
    %v154 = vand.u32 %v42, 4294901760
    %v155 = vsub.f32 %v42, %v154
    %v156 = vand.u32 %v155, 4294901760
    %v157 = vsub.f32 %v155, %v156
    %v158 = vand.u32 %v157, 4294901760
    %159 = vmatpush1.msra.mxu0 %v158
    %160 = vmatprep.subr.mxu0 0.0
    %v161 = vand.u32 %v41, 4294901760
    %v162 = vsub.f32 %v41, %v161
    %v163 = vand.u32 %v162, 4294901760
    %v164 = vsub.f32 %v162, %v163
    %v165 = vand.u32 %v164, 4294901760
    %166 = vmatpush1.msra.mxu0 %v165
    %167 = vmatprep.subr.mxu0 0.0
    %v168 = vand.u32 %v40, 4294901760
    %v169 = vsub.f32 %v40, %v168
    %v170 = vand.u32 %v169, 4294901760
    %v171 = vsub.f32 %v169, %v170
    %v172 = vand.u32 %v171, 4294901760
    %173 = vmatpush1.msra.mxu0 %v172
    %174 = vmatprep.subr.mxu0 0.0
    %v175 = vand.u32 %v39, 4294901760
    %v176 = vsub.f32 %v39, %v175
    %v177 = vand.u32 %v176, 4294901760
    %v178 = vsub.f32 %v176, %v177
    %v179 = vand.u32 %v178, 4294901760
    %180 = vmatpush1.msra.mxu0 %v179
    %181 = vmatprep.subr.mxu0 0.0
    %v182 = vand.u32 %v38, 4294901760
    %v183 = vsub.f32 %v38, %v182
    %v184 = vand.u32 %v183, 4294901760
    %v185 = vsub.f32 %v183, %v184
    %v186 = vand.u32 %v185, 4294901760
    %187 = vmatpush1.msra.mxu0 %v186
    %188 = vmatprep.subr.mxu0 0.0
    %v189 = vand.u32 %v37, 4294901760
    %v190 = vsub.f32 %v37, %v189
    %v191 = vand.u32 %v190, 4294901760
    %v192 = vsub.f32 %v190, %v191
    %v193 = vand.u32 %v192, 4294901760
    %194 = vmatpush1.msra.mxu0 %v193
    %195 = vmatprep.subr.mxu0 0.0
    %v196 = vand.u32 %v36, 4294901760
    %v197 = vsub.f32 %v36, %v196
    %v198 = vand.u32 %v197, 4294901760
    %v199 = vsub.f32 %v197, %v198
    %v200 = vand.u32 %v199, 4294901760
    %201 = vmatpush1.msra.mxu0 %v200
    %202 = vmatprep.subr.mxu0 0.0
    %v203 = vand.u32 %v35, 4294901760
    %v204 = vsub.f32 %v35, %v203
    %v205 = vand.u32 %v204, 4294901760
    %v206 = vsub.f32 %v204, %v205
    %v207 = vand.u32 %v206, 4294901760
    %208 = vmatpush1.msra.mxu0 %v207
    %209 = vmatprep.subr.mxu0 0.0
    %210 = vmatpush2.msra.mxu0 0.0
    %211 = vmatprep.subr.mxu0 0.0
    %212 = vmatpush2.msra.mxu0 0.0
    %213 = vmatprep.subr.mxu0 0.0
    %214 = vmatpush2.msra.mxu0 0.0
    %215 = vmatprep.subr.mxu0 0.0
    %216 = vmatpush2.msra.mxu0 0.0
    %217 = vmatprep.subr.mxu0 0.0
    %218 = vmatpush2.msra.mxu0 0.0
    %219 = vmatprep.subr.mxu0 0.0
    %220 = vmatpush2.msra.mxu0 0.0
    %221 = vmatprep.subr.mxu0 0.0
    %222 = vmatpush2.msra.mxu0 0.0
    %223 = vmatprep.subr.mxu0 0.0
    %224 = vmatpush2.msra.mxu0 0.0
    %225 = vmatprep.subr.mxu0 0.0
    %226 = vmatpush2.msra.mxu0 0.0
    %227 = vmatprep.subr.mxu0 0.0
    %228 = vmatpush2.msra.mxu0 0.0
    %229 = vmatprep.subr.mxu0 0.0
    %230 = vmatpush2.msra.mxu0 0.0
    %231 = vmatprep.subr.mxu0 0.0
    %232 = vmatpush2.msra.mxu0 0.0
    %233 = vmatprep.subr.mxu0 0.0
    %234 = vmatpush2.msra.mxu0 0.0
    %235 = vmatprep.subr.mxu0 0.0
    %236 = vmatpush2.msra.mxu0 0.0
    %237 = vmatprep.subr.mxu0 0.0
    %238 = vmatpush2.msra.mxu0 0.0
    %239 = vmatprep.subr.mxu0 0.0
    %240 = vmatpush2.msra.mxu0 0.0
    %241 = vmatprep.mubr.f32.mxu0 0.0
    %v242 = vand.u32 %v52, 4294901760
    %243 = vmatmul.mubr.f32.gmra.mxu0 %v242
    %v244 = vpop.f32.mrf.mxu0
    %v245 = vadd.f32 %v134, %v244
    %v246 = vpop.f32.mrf.mxu0
    %247 = vdwg.mxu0
    %248 = vmatprep.subr.mxu0 0.0
    %249 = vmatpush1.msra.mxu0 0.0
    %250 = vmatprep.subr.mxu0 0.0
    %251 = vmatpush1.msra.mxu0 0.0
    %252 = vmatprep.subr.mxu0 0.0
    %253 = vmatpush1.msra.mxu0 0.0
    %254 = vmatprep.subr.mxu0 0.0
    %255 = vmatpush1.msra.mxu0 0.0
    %256 = vmatprep.subr.mxu0 0.0
    %257 = vmatpush1.msra.mxu0 0.0
    %258 = vmatprep.subr.mxu0 0.0
    %259 = vmatpush1.msra.mxu0 0.0
    %260 = vmatprep.subr.mxu0 0.0
    %261 = vmatpush1.msra.mxu0 0.0
    %262 = vmatprep.subr.mxu0 0.0
    %263 = vmatpush1.msra.mxu0 0.0
    %264 = vmatprep.subr.mxu0 0.0
    %v265 = vand.u32 %v42, 4294901760
    %v266 = vsub.f32 %v42, %v265
    %267 = vmatpush1.msra.mxu0 %v266
    %268 = vmatprep.subr.mxu0 0.0
    %v269 = vand.u32 %v41, 4294901760
    %v270 = vsub.f32 %v41, %v269
    %271 = vmatpush1.msra.mxu0 %v270
    %272 = vmatprep.subr.mxu0 0.0
    %v273 = vand.u32 %v40, 4294901760
    %v274 = vsub.f32 %v40, %v273
    %275 = vmatpush1.msra.mxu0 %v274
    %276 = vmatprep.subr.mxu0 0.0
    %v277 = vand.u32 %v39, 4294901760
    %v278 = vsub.f32 %v39, %v277
    %279 = vmatpush1.msra.mxu0 %v278
    %280 = vmatprep.subr.mxu0 0.0
    %v281 = vand.u32 %v38, 4294901760
    %v282 = vsub.f32 %v38, %v281
    %283 = vmatpush1.msra.mxu0 %v282
    %284 = vmatprep.subr.mxu0 0.0
    %v285 = vand.u32 %v37, 4294901760
    %v286 = vsub.f32 %v37, %v285
    %287 = vmatpush1.msra.mxu0 %v286
    %288 = vmatprep.subr.mxu0 0.0
    %v289 = vand.u32 %v36, 4294901760
    %v290 = vsub.f32 %v36, %v289
    %291 = vmatpush1.msra.mxu0 %v290
    %292 = vmatprep.subr.mxu0 0.0
    %v293 = vand.u32 %v35, 4294901760
    %v294 = vsub.f32 %v35, %v293
    %295 = vmatpush1.msra.mxu0 %v294
    %296 = vmatprep.subr.mxu0 0.0
    %297 = vmatpush2.msra.mxu0 0.0
    %298 = vmatprep.subr.mxu0 0.0
    %299 = vmatpush2.msra.mxu0 0.0
    %300 = vmatprep.subr.mxu0 0.0
    %301 = vmatpush2.msra.mxu0 0.0
    %302 = vmatprep.subr.mxu0 0.0
    %303 = vmatpush2.msra.mxu0 0.0
    %304 = vmatprep.subr.mxu0 0.0
    %305 = vmatpush2.msra.mxu0 0.0
    %306 = vmatprep.subr.mxu0 0.0
    %307 = vmatpush2.msra.mxu0 0.0
    %308 = vmatprep.subr.mxu0 0.0
    %309 = vmatpush2.msra.mxu0 0.0
    %310 = vmatprep.subr.mxu0 0.0
    %311 = vmatpush2.msra.mxu0 0.0
    %312 = vmatprep.subr.mxu0 0.0
    %313 = vmatpush2.msra.mxu0 0.0
    %314 = vmatprep.subr.mxu0 0.0
    %315 = vmatpush2.msra.mxu0 0.0
    %316 = vmatprep.subr.mxu0 0.0
    %317 = vmatpush2.msra.mxu0 0.0
    %318 = vmatprep.subr.mxu0 0.0
    %319 = vmatpush2.msra.mxu0 0.0
    %320 = vmatprep.subr.mxu0 0.0
    %321 = vmatpush2.msra.mxu0 0.0
    %322 = vmatprep.subr.mxu0 0.0
    %323 = vmatpush2.msra.mxu0 0.0
    %324 = vmatprep.subr.mxu0 0.0
    %325 = vmatpush2.msra.mxu0 0.0
    %326 = vmatprep.subr.mxu0 0.0
    %327 = vmatpush2.msra.mxu0 0.0
    %328 = vmatprep.mubr.f32.mxu0 0.0
    %v329 = vand.u32 %v52, 4294901760
    %v330 = vsub.f32 %v52, %v329
    %331 = vmatmul.mubr.f32.gmra.mxu0 %v330
    %v332 = vpop.f32.mrf.mxu0
    %v333 = vadd.f32 %v245, %v332
    %v334 = vpop.f32.mrf.mxu0
    %335 = vdwg.mxu0
    %336 = vmatprep.subr.mxu0 0.0
    %337 = vmatpush1.msra.mxu0 0.0
    %338 = vmatprep.subr.mxu0 0.0
    %339 = vmatpush1.msra.mxu0 0.0
    %340 = vmatprep.subr.mxu0 0.0
    %341 = vmatpush1.msra.mxu0 0.0
    %342 = vmatprep.subr.mxu0 0.0
    %343 = vmatpush1.msra.mxu0 0.0
    %344 = vmatprep.subr.mxu0 0.0
    %345 = vmatpush1.msra.mxu0 0.0
    %346 = vmatprep.subr.mxu0 0.0
    %347 = vmatpush1.msra.mxu0 0.0
    %348 = vmatprep.subr.mxu0 0.0
    %349 = vmatpush1.msra.mxu0 0.0
    %350 = vmatprep.subr.mxu0 0.0
    %351 = vmatpush1.msra.mxu0 0.0
    %352 = vmatprep.subr.mxu0 0.0
    %v353 = vand.u32 %v42, 4294901760
    %354 = vmatpush1.msra.mxu0 %v353
    %355 = vmatprep.subr.mxu0 0.0
    %v356 = vand.u32 %v41, 4294901760
    %357 = vmatpush1.msra.mxu0 %v356
    %358 = vmatprep.subr.mxu0 0.0
    %v359 = vand.u32 %v40, 4294901760
    %360 = vmatpush1.msra.mxu0 %v359
    %361 = vmatprep.subr.mxu0 0.0
    %v362 = vand.u32 %v39, 4294901760
    %363 = vmatpush1.msra.mxu0 %v362
    %364 = vmatprep.subr.mxu0 0.0
    %v365 = vand.u32 %v38, 4294901760
    %366 = vmatpush1.msra.mxu0 %v365
    %367 = vmatprep.subr.mxu0 0.0
    %v368 = vand.u32 %v37, 4294901760
    %369 = vmatpush1.msra.mxu0 %v368
    %370 = vmatprep.subr.mxu0 0.0
    %v371 = vand.u32 %v36, 4294901760
    %372 = vmatpush1.msra.mxu0 %v371
    %373 = vmatprep.subr.mxu0 0.0
    %v374 = vand.u32 %v35, 4294901760
    %375 = vmatpush1.msra.mxu0 %v374
    %376 = vmatprep.subr.mxu0 0.0
    %377 = vmatpush2.msra.mxu0 0.0
    %378 = vmatprep.subr.mxu0 0.0
    %379 = vmatpush2.msra.mxu0 0.0
    %380 = vmatprep.subr.mxu0 0.0
    %381 = vmatpush2.msra.mxu0 0.0
    %382 = vmatprep.subr.mxu0 0.0
    %383 = vmatpush2.msra.mxu0 0.0
    %384 = vmatprep.subr.mxu0 0.0
    %385 = vmatpush2.msra.mxu0 0.0
    %386 = vmatprep.subr.mxu0 0.0
    %387 = vmatpush2.msra.mxu0 0.0
    %388 = vmatprep.subr.mxu0 0.0
    %389 = vmatpush2.msra.mxu0 0.0
    %390 = vmatprep.subr.mxu0 0.0
    %391 = vmatpush2.msra.mxu0 0.0
    %392 = vmatprep.subr.mxu0 0.0
    %393 = vmatpush2.msra.mxu0 0.0
    %394 = vmatprep.subr.mxu0 0.0
    %395 = vmatpush2.msra.mxu0 0.0
    %396 = vmatprep.subr.mxu0 0.0
    %397 = vmatpush2.msra.mxu0 0.0
    %398 = vmatprep.subr.mxu0 0.0
    %399 = vmatpush2.msra.mxu0 0.0
    %400 = vmatprep.subr.mxu0 0.0
    %401 = vmatpush2.msra.mxu0 0.0
    %402 = vmatprep.subr.mxu0 0.0
    %403 = vmatpush2.msra.mxu0 0.0
    %404 = vmatprep.subr.mxu0 0.0
    %405 = vmatpush2.msra.mxu0 0.0
    %406 = vmatprep.subr.mxu0 0.0
    %407 = vmatpush2.msra.mxu0 0.0
    %408 = vmatprep.mubr.f32.mxu0 0.0
    %v409 = vand.u32 %v52, 4294901760
    %v410 = vsub.f32 %v52, %v409
    %v411 = vand.u32 %v410, 4294901760
    %412 = vmatmul.mubr.f32.gmra.mxu0 %v411
    %v413 = vpop.f32.mrf.mxu0
    %v414 = vadd.f32 %v333, %v413
    %v415 = vpop.f32.mrf.mxu0
    %416 = vdwg.mxu0
    %417 = vmatprep.subr.mxu0 0.0
    %418 = vmatpush1.msra.mxu0 0.0
    %419 = vmatprep.subr.mxu0 0.0
    %420 = vmatpush1.msra.mxu0 0.0
    %421 = vmatprep.subr.mxu0 0.0
    %422 = vmatpush1.msra.mxu0 0.0
    %423 = vmatprep.subr.mxu0 0.0
    %424 = vmatpush1.msra.mxu0 0.0
    %425 = vmatprep.subr.mxu0 0.0
    %426 = vmatpush1.msra.mxu0 0.0
    %427 = vmatprep.subr.mxu0 0.0
    %428 = vmatpush1.msra.mxu0 0.0
    %429 = vmatprep.subr.mxu0 0.0
    %430 = vmatpush1.msra.mxu0 0.0
    %431 = vmatprep.subr.mxu0 0.0
    %432 = vmatpush1.msra.mxu0 0.0
    %433 = vmatprep.subr.mxu0 0.0
    %v434 = vand.u32 %v42, 4294901760
    %v435 = vsub.f32 %v42, %v434
    %v436 = vand.u32 %v435, 4294901760
    %437 = vmatpush1.msra.mxu0 %v436
    %438 = vmatprep.subr.mxu0 0.0
    %v439 = vand.u32 %v41, 4294901760
    %v440 = vsub.f32 %v41, %v439
    %v441 = vand.u32 %v440, 4294901760
    %442 = vmatpush1.msra.mxu0 %v441
    %443 = vmatprep.subr.mxu0 0.0
    %v444 = vand.u32 %v40, 4294901760
    %v445 = vsub.f32 %v40, %v444
    %v446 = vand.u32 %v445, 4294901760
    %447 = vmatpush1.msra.mxu0 %v446
    %448 = vmatprep.subr.mxu0 0.0
    %v449 = vand.u32 %v39, 4294901760
    %v450 = vsub.f32 %v39, %v449
    %v451 = vand.u32 %v450, 4294901760
    %452 = vmatpush1.msra.mxu0 %v451
    %453 = vmatprep.subr.mxu0 0.0
    %v454 = vand.u32 %v38, 4294901760
    %v455 = vsub.f32 %v38, %v454
    %v456 = vand.u32 %v455, 4294901760
    %457 = vmatpush1.msra.mxu0 %v456
    %458 = vmatprep.subr.mxu0 0.0
    %v459 = vand.u32 %v37, 4294901760
    %v460 = vsub.f32 %v37, %v459
    %v461 = vand.u32 %v460, 4294901760
    %462 = vmatpush1.msra.mxu0 %v461
    %463 = vmatprep.subr.mxu0 0.0
    %v464 = vand.u32 %v36, 4294901760
    %v465 = vsub.f32 %v36, %v464
    %v466 = vand.u32 %v465, 4294901760
    %467 = vmatpush1.msra.mxu0 %v466
    %468 = vmatprep.subr.mxu0 0.0
    %v469 = vand.u32 %v35, 4294901760
    %v470 = vsub.f32 %v35, %v469
    %v471 = vand.u32 %v470, 4294901760
    %472 = vmatpush1.msra.mxu0 %v471
    %473 = vmatprep.subr.mxu0 0.0
    %474 = vmatpush2.msra.mxu0 0.0
    %475 = vmatprep.subr.mxu0 0.0
    %476 = vmatpush2.msra.mxu0 0.0
    %477 = vmatprep.subr.mxu0 0.0
    %478 = vmatpush2.msra.mxu0 0.0
    %479 = vmatprep.subr.mxu0 0.0
    %480 = vmatpush2.msra.mxu0 0.0
    %481 = vmatprep.subr.mxu0 0.0
    %482 = vmatpush2.msra.mxu0 0.0
    %483 = vmatprep.subr.mxu0 0.0
    %484 = vmatpush2.msra.mxu0 0.0
    %485 = vmatprep.subr.mxu0 0.0
    %486 = vmatpush2.msra.mxu0 0.0
    %487 = vmatprep.subr.mxu0 0.0
    %488 = vmatpush2.msra.mxu0 0.0
    %489 = vmatprep.subr.mxu0 0.0
    %490 = vmatpush2.msra.mxu0 0.0
    %491 = vmatprep.subr.mxu0 0.0
    %492 = vmatpush2.msra.mxu0 0.0
    %493 = vmatprep.subr.mxu0 0.0
    %494 = vmatpush2.msra.mxu0 0.0
    %495 = vmatprep.subr.mxu0 0.0
    %496 = vmatpush2.msra.mxu0 0.0
    %497 = vmatprep.subr.mxu0 0.0
    %498 = vmatpush2.msra.mxu0 0.0
    %499 = vmatprep.subr.mxu0 0.0
    %500 = vmatpush2.msra.mxu0 0.0
    %501 = vmatprep.subr.mxu0 0.0
    %502 = vmatpush2.msra.mxu0 0.0
    %503 = vmatprep.subr.mxu0 0.0
    %504 = vmatpush2.msra.mxu0 0.0
    %505 = vmatprep.mubr.f32.mxu0 0.0
    %v506 = vand.u32 %v52, 4294901760
    %507 = vmatmul.mubr.f32.gmra.mxu0 %v506
    %v508 = vpop.f32.mrf.mxu0
    %v509 = vadd.f32 %v414, %v508
    %v510 = vpop.f32.mrf.mxu0
    %511 = vdwg.mxu0
    %512 = vmatprep.subr.mxu0 0.0
    %513 = vmatpush1.msra.mxu0 0.0
    %514 = vmatprep.subr.mxu0 0.0
    %515 = vmatpush1.msra.mxu0 0.0
    %516 = vmatprep.subr.mxu0 0.0
    %517 = vmatpush1.msra.mxu0 0.0
    %518 = vmatprep.subr.mxu0 0.0
    %519 = vmatpush1.msra.mxu0 0.0
    %520 = vmatprep.subr.mxu0 0.0
    %521 = vmatpush1.msra.mxu0 0.0
    %522 = vmatprep.subr.mxu0 0.0
    %523 = vmatpush1.msra.mxu0 0.0
    %524 = vmatprep.subr.mxu0 0.0
    %525 = vmatpush1.msra.mxu0 0.0
    %526 = vmatprep.subr.mxu0 0.0
    %527 = vmatpush1.msra.mxu0 0.0
    %528 = vmatprep.subr.mxu0 0.0
    %v529 = vand.u32 %v42, 4294901760
    %530 = vmatpush1.msra.mxu0 %v529
    %531 = vmatprep.subr.mxu0 0.0
    %v532 = vand.u32 %v41, 4294901760
    %533 = vmatpush1.msra.mxu0 %v532
    %534 = vmatprep.subr.mxu0 0.0
    %v535 = vand.u32 %v40, 4294901760
    %536 = vmatpush1.msra.mxu0 %v535
    %537 = vmatprep.subr.mxu0 0.0
    %v538 = vand.u32 %v39, 4294901760
    %539 = vmatpush1.msra.mxu0 %v538
    %540 = vmatprep.subr.mxu0 0.0
    %v541 = vand.u32 %v38, 4294901760
    %542 = vmatpush1.msra.mxu0 %v541
    %543 = vmatprep.subr.mxu0 0.0
    %v544 = vand.u32 %v37, 4294901760
    %545 = vmatpush1.msra.mxu0 %v544
    %546 = vmatprep.subr.mxu0 0.0
    %v547 = vand.u32 %v36, 4294901760
    %548 = vmatpush1.msra.mxu0 %v547
    %549 = vmatprep.subr.mxu0 0.0
    %v550 = vand.u32 %v35, 4294901760
    %551 = vmatpush1.msra.mxu0 %v550
    %552 = vmatprep.subr.mxu0 0.0
    %553 = vmatpush2.msra.mxu0 0.0
    %554 = vmatprep.subr.mxu0 0.0
    %555 = vmatpush2.msra.mxu0 0.0
    %556 = vmatprep.subr.mxu0 0.0
    %557 = vmatpush2.msra.mxu0 0.0
    %558 = vmatprep.subr.mxu0 0.0
    %559 = vmatpush2.msra.mxu0 0.0
    %560 = vmatprep.subr.mxu0 0.0
    %561 = vmatpush2.msra.mxu0 0.0
    %562 = vmatprep.subr.mxu0 0.0
    %563 = vmatpush2.msra.mxu0 0.0
    %564 = vmatprep.subr.mxu0 0.0
    %565 = vmatpush2.msra.mxu0 0.0
    %566 = vmatprep.subr.mxu0 0.0
    %567 = vmatpush2.msra.mxu0 0.0
    %568 = vmatprep.subr.mxu0 0.0
    %569 = vmatpush2.msra.mxu0 0.0
    %570 = vmatprep.subr.mxu0 0.0
    %571 = vmatpush2.msra.mxu0 0.0
    %572 = vmatprep.subr.mxu0 0.0
    %573 = vmatpush2.msra.mxu0 0.0
    %574 = vmatprep.subr.mxu0 0.0
    %575 = vmatpush2.msra.mxu0 0.0
    %576 = vmatprep.subr.mxu0 0.0
    %577 = vmatpush2.msra.mxu0 0.0
    %578 = vmatprep.subr.mxu0 0.0
    %579 = vmatpush2.msra.mxu0 0.0
    %580 = vmatprep.subr.mxu0 0.0
    %581 = vmatpush2.msra.mxu0 0.0
    %582 = vmatprep.subr.mxu0 0.0
    %583 = vmatpush2.msra.mxu0 0.0
    %584 = vmatprep.mubr.f32.mxu0 0.0
    %v585 = vand.u32 %v52, 4294901760
    %586 = vmatmul.mubr.f32.gmra.mxu0 %v585
    %v587 = vpop.f32.mrf.mxu0
    %v588 = vadd.f32 %v509, %v587
    %v589 = vpop.f32.mrf.mxu0
    %590 = vdwg.mxu0
    %v591 = vld [vmem:[%s6] sm:$0xff]
    %v592 = vld [vmem:[%s6 + $0x8] sm:$0xff]
    %v593 = vld [vmem:[%s6 + $0x10] sm:$0xff]
    %v594 = vld [vmem:[%s6 + $0x18] sm:$0xff]
    %v595 = vld [vmem:[%s6 + $0x20] sm:$0xff]
    %v596 = vld [vmem:[%s6 + $0x28] sm:$0xff]
    %v597 = vld [vmem:[%s6 + $0x30] sm:$0xff]
    %v598 = vld [vmem:[%s6 + $0x38] sm:$0xff]
    %vm599 = vcmask 261120
    %v601 = vsel %vm599, %v588, 0
    %603 = vmatprep.subr.mxu0 0.0
    %604 = vmatpush1.msra.mxu0 0.0
    %605 = vmatprep.subr.mxu0 0.0
    %606 = vmatpush1.msra.mxu0 0.0
    %607 = vmatprep.subr.mxu0 0.0
    %608 = vmatpush1.msra.mxu0 0.0
    %609 = vmatprep.subr.mxu0 0.0
    %610 = vmatpush1.msra.mxu0 0.0
    %611 = vmatprep.subr.mxu0 0.0
    %612 = vmatpush1.msra.mxu0 0.0
    %613 = vmatprep.subr.mxu0 0.0
    %614 = vmatpush1.msra.mxu0 0.0
    %615 = vmatprep.subr.mxu0 0.0
    %616 = vmatpush1.msra.mxu0 0.0
    %617 = vmatprep.subr.mxu0 0.0
    %618 = vmatpush1.msra.mxu0 0.0
    %619 = vmatprep.subr.mxu0 0.0
    %620 = vmatpush1.msra.mxu0 0.0
    %621 = vmatprep.subr.mxu0 0.0
    %622 = vmatpush1.msra.mxu0 0.0
    %623 = vmatprep.subr.mxu0 0.0
    %624 = vmatpush1.msra.mxu0 0.0
    %625 = vmatprep.subr.mxu0 0.0
    %626 = vmatpush1.msra.mxu0 0.0
    %627 = vmatprep.subr.mxu0 0.0
    %v628 = vand.u32 %v598, 4294901760
    %629 = vmatpush1.msra.mxu0 %v628
    %630 = vmatprep.subr.mxu0 0.0
    %v631 = vand.u32 %v597, 4294901760
    %632 = vmatpush1.msra.mxu0 %v631
    %633 = vmatprep.subr.mxu0 0.0
    %v634 = vand.u32 %v596, 4294901760
    %635 = vmatpush1.msra.mxu0 %v634
    %636 = vmatprep.subr.mxu0 0.0
    %v637 = vand.u32 %v595, 4294901760
    %638 = vmatpush1.msra.mxu0 %v637
    %639 = vmatprep.subr.mxu0 0.0
    %640 = vmatpush2.msra.mxu0 0.0
    %641 = vmatprep.subr.mxu0 0.0
    %642 = vmatpush2.msra.mxu0 0.0
    %643 = vmatprep.subr.mxu0 0.0
    %644 = vmatpush2.msra.mxu0 0.0
    %645 = vmatprep.subr.mxu0 0.0
    %646 = vmatpush2.msra.mxu0 0.0
    %647 = vmatprep.subr.mxu0 0.0
    %648 = vmatpush2.msra.mxu0 0.0
    %649 = vmatprep.subr.mxu0 0.0
    %650 = vmatpush2.msra.mxu0 0.0
    %651 = vmatprep.subr.mxu0 0.0
    %652 = vmatpush2.msra.mxu0 0.0
    %653 = vmatprep.subr.mxu0 0.0
    %654 = vmatpush2.msra.mxu0 0.0
    %655 = vmatprep.subr.mxu0 0.0
    %656 = vmatpush2.msra.mxu0 0.0
    %657 = vmatprep.subr.mxu0 0.0
    %658 = vmatpush2.msra.mxu0 0.0
    %659 = vmatprep.subr.mxu0 0.0
    %660 = vmatpush2.msra.mxu0 0.0
    %661 = vmatprep.subr.mxu0 0.0
    %662 = vmatpush2.msra.mxu0 0.0
    %663 = vmatprep.subr.mxu0 0.0
    %664 = vmatpush2.msra.mxu0 0.0
    %665 = vmatprep.subr.mxu0 0.0
    %666 = vmatpush2.msra.mxu0 0.0
    %667 = vmatprep.subr.mxu0 0.0
    %668 = vmatpush2.msra.mxu0 0.0
    %669 = vmatprep.subr.mxu0 0.0
    %670 = vmatpush2.msra.mxu0 0.0
    %671 = vmatprep.mubr.f32.mxu0 0.0
    %v672 = vand.u32 %v601, 4294901760
    %v673 = vsub.f32 %v601, %v672
    %v674 = vand.u32 %v673, 4294901760
    %v675 = vsub.f32 %v673, %v674
    %v676 = vand.u32 %v675, 4294901760
    %677 = vmatmul.mubr.f32.gmra.mxu0 %v676
    %v678 = vpop.f32.mrf.mxu0
    %v679 = vadd.f32 0.0, %v678
    %v680 = vpop.f32.mrf.mxu0
    %681 = vdwg.mxu0
    %682 = vmatprep.subr.mxu0 0.0
    %683 = vmatpush1.msra.mxu0 0.0
    %684 = vmatprep.subr.mxu0 0.0
    %685 = vmatpush1.msra.mxu0 0.0
    %686 = vmatprep.subr.mxu0 0.0
    %687 = vmatpush1.msra.mxu0 0.0
    %688 = vmatprep.subr.mxu0 0.0
    %689 = vmatpush1.msra.mxu0 0.0
    %690 = vmatprep.subr.mxu0 0.0
    %691 = vmatpush1.msra.mxu0 0.0
    %692 = vmatprep.subr.mxu0 0.0
    %693 = vmatpush1.msra.mxu0 0.0
    %694 = vmatprep.subr.mxu0 0.0
    %695 = vmatpush1.msra.mxu0 0.0
    %696 = vmatprep.subr.mxu0 0.0
    %697 = vmatpush1.msra.mxu0 0.0
    %698 = vmatprep.subr.mxu0 0.0
    %699 = vmatpush1.msra.mxu0 0.0
    %700 = vmatprep.subr.mxu0 0.0
    %701 = vmatpush1.msra.mxu0 0.0
    %702 = vmatprep.subr.mxu0 0.0
    %703 = vmatpush1.msra.mxu0 0.0
    %704 = vmatprep.subr.mxu0 0.0
    %705 = vmatpush1.msra.mxu0 0.0
    %706 = vmatprep.subr.mxu0 0.0
    %v707 = vand.u32 %v598, 4294901760
    %v708 = vsub.f32 %v598, %v707
    %v709 = vand.u32 %v708, 4294901760
    %v710 = vsub.f32 %v708, %v709
    %v711 = vand.u32 %v710, 4294901760
    %712 = vmatpush1.msra.mxu0 %v711
    %713 = vmatprep.subr.mxu0 0.0
    %v714 = vand.u32 %v597, 4294901760
    %v715 = vsub.f32 %v597, %v714
    %v716 = vand.u32 %v715, 4294901760
    %v717 = vsub.f32 %v715, %v716
    %v718 = vand.u32 %v717, 4294901760
    %719 = vmatpush1.msra.mxu0 %v718
    %720 = vmatprep.subr.mxu0 0.0
    %v721 = vand.u32 %v596, 4294901760
    %v722 = vsub.f32 %v596, %v721
    %v723 = vand.u32 %v722, 4294901760
    %v724 = vsub.f32 %v722, %v723
    %v725 = vand.u32 %v724, 4294901760
    %726 = vmatpush1.msra.mxu0 %v725
    %727 = vmatprep.subr.mxu0 0.0
    %v728 = vand.u32 %v595, 4294901760
    %v729 = vsub.f32 %v595, %v728
    %v730 = vand.u32 %v729, 4294901760
    %v731 = vsub.f32 %v729, %v730
    %v732 = vand.u32 %v731, 4294901760
    %733 = vmatpush1.msra.mxu0 %v732
    %734 = vmatprep.subr.mxu0 0.0
    %735 = vmatpush2.msra.mxu0 0.0
    %736 = vmatprep.subr.mxu0 0.0
    %737 = vmatpush2.msra.mxu0 0.0
    %738 = vmatprep.subr.mxu0 0.0
    %739 = vmatpush2.msra.mxu0 0.0
    %740 = vmatprep.subr.mxu0 0.0
    %741 = vmatpush2.msra.mxu0 0.0
    %742 = vmatprep.subr.mxu0 0.0
    %743 = vmatpush2.msra.mxu0 0.0
    %744 = vmatprep.subr.mxu0 0.0
    %745 = vmatpush2.msra.mxu0 0.0
    %746 = vmatprep.subr.mxu0 0.0
    %747 = vmatpush2.msra.mxu0 0.0
    %748 = vmatprep.subr.mxu0 0.0
    %749 = vmatpush2.msra.mxu0 0.0
    %750 = vmatprep.subr.mxu0 0.0
    %751 = vmatpush2.msra.mxu0 0.0
    %752 = vmatprep.subr.mxu0 0.0
    %753 = vmatpush2.msra.mxu0 0.0
    %754 = vmatprep.subr.mxu0 0.0
    %755 = vmatpush2.msra.mxu0 0.0
    %756 = vmatprep.subr.mxu0 0.0
    %757 = vmatpush2.msra.mxu0 0.0
    %758 = vmatprep.subr.mxu0 0.0
    %759 = vmatpush2.msra.mxu0 0.0
    %760 = vmatprep.subr.mxu0 0.0
    %761 = vmatpush2.msra.mxu0 0.0
    %762 = vmatprep.subr.mxu0 0.0
    %763 = vmatpush2.msra.mxu0 0.0
    %764 = vmatprep.subr.mxu0 0.0
    %765 = vmatpush2.msra.mxu0 0.0
    %766 = vmatprep.mubr.f32.mxu0 0.0
    %v767 = vand.u32 %v601, 4294901760
    %768 = vmatmul.mubr.f32.gmra.mxu0 %v767
    %v769 = vpop.f32.mrf.mxu0
    %v770 = vadd.f32 %v679, %v769
    %v771 = vpop.f32.mrf.mxu0
    %772 = vdwg.mxu0
    %773 = vmatprep.subr.mxu0 0.0
    %774 = vmatpush1.msra.mxu0 0.0
    %775 = vmatprep.subr.mxu0 0.0
    %776 = vmatpush1.msra.mxu0 0.0
    %777 = vmatprep.subr.mxu0 0.0
    %778 = vmatpush1.msra.mxu0 0.0
    %779 = vmatprep.subr.mxu0 0.0
    %780 = vmatpush1.msra.mxu0 0.0
    %781 = vmatprep.subr.mxu0 0.0
    %782 = vmatpush1.msra.mxu0 0.0
    %783 = vmatprep.subr.mxu0 0.0
    %784 = vmatpush1.msra.mxu0 0.0
    %785 = vmatprep.subr.mxu0 0.0
    %786 = vmatpush1.msra.mxu0 0.0
    %787 = vmatprep.subr.mxu0 0.0
    %788 = vmatpush1.msra.mxu0 0.0
    %789 = vmatprep.subr.mxu0 0.0
    %790 = vmatpush1.msra.mxu0 0.0
    %791 = vmatprep.subr.mxu0 0.0
    %792 = vmatpush1.msra.mxu0 0.0
    %793 = vmatprep.subr.mxu0 0.0
    %794 = vmatpush1.msra.mxu0 0.0
    %795 = vmatprep.subr.mxu0 0.0
    %796 = vmatpush1.msra.mxu0 0.0
    %797 = vmatprep.subr.mxu0 0.0
    %v798 = vand.u32 %v598, 4294901760
    %v799 = vsub.f32 %v598, %v798
    %800 = vmatpush1.msra.mxu0 %v799
    %801 = vmatprep.subr.mxu0 0.0
    %v802 = vand.u32 %v597, 4294901760
    %v803 = vsub.f32 %v597, %v802
    %804 = vmatpush1.msra.mxu0 %v803
    %805 = vmatprep.subr.mxu0 0.0
    %v806 = vand.u32 %v596, 4294901760
    %v807 = vsub.f32 %v596, %v806
    %808 = vmatpush1.msra.mxu0 %v807
    %809 = vmatprep.subr.mxu0 0.0
    %v810 = vand.u32 %v595, 4294901760
    %v811 = vsub.f32 %v595, %v810
    %812 = vmatpush1.msra.mxu0 %v811
    %813 = vmatprep.subr.mxu0 0.0
    %814 = vmatpush2.msra.mxu0 0.0
    %815 = vmatprep.subr.mxu0 0.0
    %816 = vmatpush2.msra.mxu0 0.0
    %817 = vmatprep.subr.mxu0 0.0
    %818 = vmatpush2.msra.mxu0 0.0
    %819 = vmatprep.subr.mxu0 0.0
    %820 = vmatpush2.msra.mxu0 0.0
    %821 = vmatprep.subr.mxu0 0.0
    %822 = vmatpush2.msra.mxu0 0.0
    %823 = vmatprep.subr.mxu0 0.0
    %824 = vmatpush2.msra.mxu0 0.0
    %825 = vmatprep.subr.mxu0 0.0
    %826 = vmatpush2.msra.mxu0 0.0
    %827 = vmatprep.subr.mxu0 0.0
    %828 = vmatpush2.msra.mxu0 0.0
    %829 = vmatprep.subr.mxu0 0.0
    %830 = vmatpush2.msra.mxu0 0.0
    %831 = vmatprep.subr.mxu0 0.0
    %832 = vmatpush2.msra.mxu0 0.0
    %833 = vmatprep.subr.mxu0 0.0
    %834 = vmatpush2.msra.mxu0 0.0
    %835 = vmatprep.subr.mxu0 0.0
    %836 = vmatpush2.msra.mxu0 0.0
    %837 = vmatprep.subr.mxu0 0.0
    %838 = vmatpush2.msra.mxu0 0.0
    %839 = vmatprep.subr.mxu0 0.0
    %840 = vmatpush2.msra.mxu0 0.0
    %841 = vmatprep.subr.mxu0 0.0
    %842 = vmatpush2.msra.mxu0 0.0
    %843 = vmatprep.subr.mxu0 0.0
    %844 = vmatpush2.msra.mxu0 0.0
    %845 = vmatprep.mubr.f32.mxu0 0.0
    %v846 = vand.u32 %v601, 4294901760
    %v847 = vsub.f32 %v601, %v846
    %848 = vmatmul.mubr.f32.gmra.mxu0 %v847
    %v849 = vpop.f32.mrf.mxu0
    %v850 = vadd.f32 %v770, %v849
    %v851 = vpop.f32.mrf.mxu0
    %852 = vdwg.mxu0
    %853 = vmatprep.subr.mxu0 0.0
    %854 = vmatpush1.msra.mxu0 0.0
    %855 = vmatprep.subr.mxu0 0.0
    %856 = vmatpush1.msra.mxu0 0.0
    %857 = vmatprep.subr.mxu0 0.0
    %858 = vmatpush1.msra.mxu0 0.0
    %859 = vmatprep.subr.mxu0 0.0
    %860 = vmatpush1.msra.mxu0 0.0
    %861 = vmatprep.subr.mxu0 0.0
    %862 = vmatpush1.msra.mxu0 0.0
    %863 = vmatprep.subr.mxu0 0.0
    %864 = vmatpush1.msra.mxu0 0.0
    %865 = vmatprep.subr.mxu0 0.0
    %866 = vmatpush1.msra.mxu0 0.0
    %867 = vmatprep.subr.mxu0 0.0
    %868 = vmatpush1.msra.mxu0 0.0
    %869 = vmatprep.subr.mxu0 0.0
    %870 = vmatpush1.msra.mxu0 0.0
    %871 = vmatprep.subr.mxu0 0.0
    %872 = vmatpush1.msra.mxu0 0.0
    %873 = vmatprep.subr.mxu0 0.0
    %874 = vmatpush1.msra.mxu0 0.0
    %875 = vmatprep.subr.mxu0 0.0
    %876 = vmatpush1.msra.mxu0 0.0
    %877 = vmatprep.subr.mxu0 0.0
    %v878 = vand.u32 %v598, 4294901760
    %879 = vmatpush1.msra.mxu0 %v878
    %880 = vmatprep.subr.mxu0 0.0
    %v881 = vand.u32 %v597, 4294901760
    %882 = vmatpush1.msra.mxu0 %v881
    %883 = vmatprep.subr.mxu0 0.0
    %v884 = vand.u32 %v596, 4294901760
    %885 = vmatpush1.msra.mxu0 %v884
    %886 = vmatprep.subr.mxu0 0.0
    %v887 = vand.u32 %v595, 4294901760
    %888 = vmatpush1.msra.mxu0 %v887
    %889 = vmatprep.subr.mxu0 0.0
    %890 = vmatpush2.msra.mxu0 0.0
    %891 = vmatprep.subr.mxu0 0.0
    %892 = vmatpush2.msra.mxu0 0.0
    %893 = vmatprep.subr.mxu0 0.0
    %894 = vmatpush2.msra.mxu0 0.0
    %895 = vmatprep.subr.mxu0 0.0
    %896 = vmatpush2.msra.mxu0 0.0
    %897 = vmatprep.subr.mxu0 0.0
    %898 = vmatpush2.msra.mxu0 0.0
    %899 = vmatprep.subr.mxu0 0.0
    %900 = vmatpush2.msra.mxu0 0.0
    %901 = vmatprep.subr.mxu0 0.0
    %902 = vmatpush2.msra.mxu0 0.0
    %903 = vmatprep.subr.mxu0 0.0
    %904 = vmatpush2.msra.mxu0 0.0
    %905 = vmatprep.subr.mxu0 0.0
    %906 = vmatpush2.msra.mxu0 0.0
    %907 = vmatprep.subr.mxu0 0.0
    %908 = vmatpush2.msra.mxu0 0.0
    %909 = vmatprep.subr.mxu0 0.0
    %910 = vmatpush2.msra.mxu0 0.0
    %911 = vmatprep.subr.mxu0 0.0
    %912 = vmatpush2.msra.mxu0 0.0
    %913 = vmatprep.subr.mxu0 0.0
    %914 = vmatpush2.msra.mxu0 0.0
    %915 = vmatprep.subr.mxu0 0.0
    %916 = vmatpush2.msra.mxu0 0.0
    %917 = vmatprep.subr.mxu0 0.0
    %918 = vmatpush2.msra.mxu0 0.0
    %919 = vmatprep.subr.mxu0 0.0
    %920 = vmatpush2.msra.mxu0 0.0
    %921 = vmatprep.mubr.f32.mxu0 0.0
    %v922 = vand.u32 %v601, 4294901760
    %v923 = vsub.f32 %v601, %v922
    %v924 = vand.u32 %v923, 4294901760
    %925 = vmatmul.mubr.f32.gmra.mxu0 %v924
    %v926 = vpop.f32.mrf.mxu0
    %v927 = vadd.f32 %v850, %v926
    %v928 = vpop.f32.mrf.mxu0
    %929 = vdwg.mxu0
    %930 = vmatprep.subr.mxu0 0.0
    %931 = vmatpush1.msra.mxu0 0.0
    %932 = vmatprep.subr.mxu0 0.0
    %933 = vmatpush1.msra.mxu0 0.0
    %934 = vmatprep.subr.mxu0 0.0
    %935 = vmatpush1.msra.mxu0 0.0
    %936 = vmatprep.subr.mxu0 0.0
    %937 = vmatpush1.msra.mxu0 0.0
    %938 = vmatprep.subr.mxu0 0.0
    %939 = vmatpush1.msra.mxu0 0.0
    %940 = vmatprep.subr.mxu0 0.0
    %941 = vmatpush1.msra.mxu0 0.0
    %942 = vmatprep.subr.mxu0 0.0
    %943 = vmatpush1.msra.mxu0 0.0
    %944 = vmatprep.subr.mxu0 0.0
    %945 = vmatpush1.msra.mxu0 0.0
    %946 = vmatprep.subr.mxu0 0.0
    %947 = vmatpush1.msra.mxu0 0.0
    %948 = vmatprep.subr.mxu0 0.0
    %949 = vmatpush1.msra.mxu0 0.0
    %950 = vmatprep.subr.mxu0 0.0
    %951 = vmatpush1.msra.mxu0 0.0
    %952 = vmatprep.subr.mxu0 0.0
    %953 = vmatpush1.msra.mxu0 0.0
    %954 = vmatprep.subr.mxu0 0.0
    %v955 = vand.u32 %v598, 4294901760
    %v956 = vsub.f32 %v598, %v955
    %v957 = vand.u32 %v956, 4294901760
    %958 = vmatpush1.msra.mxu0 %v957
    %959 = vmatprep.subr.mxu0 0.0
    %v960 = vand.u32 %v597, 4294901760
    %v961 = vsub.f32 %v597, %v960
    %v962 = vand.u32 %v961, 4294901760
    %963 = vmatpush1.msra.mxu0 %v962
    %964 = vmatprep.subr.mxu0 0.0
    %v965 = vand.u32 %v596, 4294901760
    %v966 = vsub.f32 %v596, %v965
    %v967 = vand.u32 %v966, 4294901760
    %968 = vmatpush1.msra.mxu0 %v967
    %969 = vmatprep.subr.mxu0 0.0
    %v970 = vand.u32 %v595, 4294901760
    %v971 = vsub.f32 %v595, %v970
    %v972 = vand.u32 %v971, 4294901760
    %973 = vmatpush1.msra.mxu0 %v972
    %974 = vmatprep.subr.mxu0 0.0
    %975 = vmatpush2.msra.mxu0 0.0
    %976 = vmatprep.subr.mxu0 0.0
    %977 = vmatpush2.msra.mxu0 0.0
    %978 = vmatprep.subr.mxu0 0.0
    %979 = vmatpush2.msra.mxu0 0.0
    %980 = vmatprep.subr.mxu0 0.0
    %981 = vmatpush2.msra.mxu0 0.0
    %982 = vmatprep.subr.mxu0 0.0
    %983 = vmatpush2.msra.mxu0 0.0
    %984 = vmatprep.subr.mxu0 0.0
    %985 = vmatpush2.msra.mxu0 0.0
    %986 = vmatprep.subr.mxu0 0.0
    %987 = vmatpush2.msra.mxu0 0.0
    %988 = vmatprep.subr.mxu0 0.0
    %989 = vmatpush2.msra.mxu0 0.0
    %990 = vmatprep.subr.mxu0 0.0
    %991 = vmatpush2.msra.mxu0 0.0
    %992 = vmatprep.subr.mxu0 0.0
    %993 = vmatpush2.msra.mxu0 0.0
    %994 = vmatprep.subr.mxu0 0.0
    %995 = vmatpush2.msra.mxu0 0.0
    %996 = vmatprep.subr.mxu0 0.0
    %997 = vmatpush2.msra.mxu0 0.0
    %998 = vmatprep.subr.mxu0 0.0
    %999 = vmatpush2.msra.mxu0 0.0
    %1000 = vmatprep.subr.mxu0 0.0
    %1001 = vmatpush2.msra.mxu0 0.0
    %1002 = vmatprep.subr.mxu0 0.0
    %1003 = vmatpush2.msra.mxu0 0.0
    %1004 = vmatprep.subr.mxu0 0.0
    %1005 = vmatpush2.msra.mxu0 0.0
    %1006 = vmatprep.mubr.f32.mxu0 0.0
    %v1007 = vand.u32 %v601, 4294901760
    %1008 = vmatmul.mubr.f32.gmra.mxu0 %v1007
    %v1009 = vpop.f32.mrf.mxu0
    %v1010 = vadd.f32 %v927, %v1009
    %v1011 = vpop.f32.mrf.mxu0
    %1012 = vdwg.mxu0
    %1013 = vmatprep.subr.mxu0 0.0
    %1014 = vmatpush1.msra.mxu0 0.0
    %1015 = vmatprep.subr.mxu0 0.0
    %1016 = vmatpush1.msra.mxu0 0.0
    %1017 = vmatprep.subr.mxu0 0.0
    %1018 = vmatpush1.msra.mxu0 0.0
    %1019 = vmatprep.subr.mxu0 0.0
    %1020 = vmatpush1.msra.mxu0 0.0
    %1021 = vmatprep.subr.mxu0 0.0
    %1022 = vmatpush1.msra.mxu0 0.0
    %1023 = vmatprep.subr.mxu0 0.0
    %1024 = vmatpush1.msra.mxu0 0.0
    %1025 = vmatprep.subr.mxu0 0.0
    %1026 = vmatpush1.msra.mxu0 0.0
    %1027 = vmatprep.subr.mxu0 0.0
    %1028 = vmatpush1.msra.mxu0 0.0
    %1029 = vmatprep.subr.mxu0 0.0
    %1030 = vmatpush1.msra.mxu0 0.0
    %1031 = vmatprep.subr.mxu0 0.0
    %1032 = vmatpush1.msra.mxu0 0.0
    %1033 = vmatprep.subr.mxu0 0.0
    %1034 = vmatpush1.msra.mxu0 0.0
    %1035 = vmatprep.subr.mxu0 0.0
    %1036 = vmatpush1.msra.mxu0 0.0
    %1037 = vmatprep.subr.mxu0 0.0
    %v1038 = vand.u32 %v598, 4294901760
    %1039 = vmatpush1.msra.mxu0 %v1038
    %1040 = vmatprep.subr.mxu0 0.0
    %v1041 = vand.u32 %v597, 4294901760
    %1042 = vmatpush1.msra.mxu0 %v1041
    %1043 = vmatprep.subr.mxu0 0.0
    %v1044 = vand.u32 %v596, 4294901760
    %1045 = vmatpush1.msra.mxu0 %v1044
    %1046 = vmatprep.subr.mxu0 0.0
    %v1047 = vand.u32 %v595, 4294901760
    %1048 = vmatpush1.msra.mxu0 %v1047
    %1049 = vmatprep.subr.mxu0 0.0
    %1050 = vmatpush2.msra.mxu0 0.0
    %1051 = vmatprep.subr.mxu0 0.0
    %1052 = vmatpush2.msra.mxu0 0.0
    %1053 = vmatprep.subr.mxu0 0.0
    %1054 = vmatpush2.msra.mxu0 0.0
    %1055 = vmatprep.subr.mxu0 0.0
    %1056 = vmatpush2.msra.mxu0 0.0
    %1057 = vmatprep.subr.mxu0 0.0
    %1058 = vmatpush2.msra.mxu0 0.0
    %1059 = vmatprep.subr.mxu0 0.0
    %1060 = vmatpush2.msra.mxu0 0.0
    %1061 = vmatprep.subr.mxu0 0.0
    %1062 = vmatpush2.msra.mxu0 0.0
    %1063 = vmatprep.subr.mxu0 0.0
    %1064 = vmatpush2.msra.mxu0 0.0
    %1065 = vmatprep.subr.mxu0 0.0
    %1066 = vmatpush2.msra.mxu0 0.0
    %1067 = vmatprep.subr.mxu0 0.0
    %1068 = vmatpush2.msra.mxu0 0.0
    %1069 = vmatprep.subr.mxu0 0.0
    %1070 = vmatpush2.msra.mxu0 0.0
    %1071 = vmatprep.subr.mxu0 0.0
    %1072 = vmatpush2.msra.mxu0 0.0
    %1073 = vmatprep.subr.mxu0 0.0
    %1074 = vmatpush2.msra.mxu0 0.0
    %1075 = vmatprep.subr.mxu0 0.0
    %1076 = vmatpush2.msra.mxu0 0.0
    %1077 = vmatprep.subr.mxu0 0.0
    %1078 = vmatpush2.msra.mxu0 0.0
    %1079 = vmatprep.subr.mxu0 0.0
    %1080 = vmatpush2.msra.mxu0 0.0
    %1081 = vmatprep.mubr.f32.mxu0 0.0
    %v1082 = vand.u32 %v601, 4294901760
    %1083 = vmatmul.mubr.f32.gmra.mxu0 %v1082
    %v1084 = vpop.f32.mrf.mxu0
    %v1085 = vadd.f32 %v1010, %v1084
    %v1086 = vpop.f32.mrf.mxu0
    %1087 = vdwg.mxu0
    %v1089 = vsel %vm599, %v31, 0
    %1091 = vmatprep.subr.mxu0 0.0
    %1092 = vmatpush1.msra.mxu0 0.0
    %1093 = vmatprep.subr.mxu0 0.0
    %1094 = vmatpush1.msra.mxu0 0.0
    %1095 = vmatprep.subr.mxu0 0.0
    %1096 = vmatpush1.msra.mxu0 0.0
    %1097 = vmatprep.subr.mxu0 0.0
    %1098 = vmatpush1.msra.mxu0 0.0
    %1099 = vmatprep.subr.mxu0 0.0
    %1100 = vmatpush1.msra.mxu0 0.0
    %1101 = vmatprep.subr.mxu0 0.0
    %1102 = vmatpush1.msra.mxu0 0.0
    %1103 = vmatprep.subr.mxu0 0.0
    %1104 = vmatpush1.msra.mxu0 0.0
    %1105 = vmatprep.subr.mxu0 0.0
    %1106 = vmatpush1.msra.mxu0 0.0
    %1107 = vmatprep.subr.mxu0 0.0
    %1108 = vmatpush1.msra.mxu0 0.0
    %1109 = vmatprep.subr.mxu0 0.0
    %1110 = vmatpush1.msra.mxu0 0.0
    %1111 = vmatprep.subr.mxu0 0.0
    %1112 = vmatpush1.msra.mxu0 0.0
    %1113 = vmatprep.subr.mxu0 0.0
    %1114 = vmatpush1.msra.mxu0 0.0
    %1115 = vmatprep.subr.mxu0 0.0
    %v1116 = vand.u32 %v594, 4294901760
    %1117 = vmatpush1.msra.mxu0 %v1116
    %1118 = vmatprep.subr.mxu0 0.0
    %v1119 = vand.u32 %v593, 4294901760
    %1120 = vmatpush1.msra.mxu0 %v1119
    %1121 = vmatprep.subr.mxu0 0.0
    %v1122 = vand.u32 %v592, 4294901760
    %1123 = vmatpush1.msra.mxu0 %v1122
    %1124 = vmatprep.subr.mxu0 0.0
    %v1125 = vand.u32 %v591, 4294901760
    %1126 = vmatpush1.msra.mxu0 %v1125
    %1127 = vmatprep.subr.mxu0 0.0
    %1128 = vmatpush2.msra.mxu0 0.0
    %1129 = vmatprep.subr.mxu0 0.0
    %1130 = vmatpush2.msra.mxu0 0.0
    %1131 = vmatprep.subr.mxu0 0.0
    %1132 = vmatpush2.msra.mxu0 0.0
    %1133 = vmatprep.subr.mxu0 0.0
    %1134 = vmatpush2.msra.mxu0 0.0
    %1135 = vmatprep.subr.mxu0 0.0
    %1136 = vmatpush2.msra.mxu0 0.0
    %1137 = vmatprep.subr.mxu0 0.0
    %1138 = vmatpush2.msra.mxu0 0.0
    %1139 = vmatprep.subr.mxu0 0.0
    %1140 = vmatpush2.msra.mxu0 0.0
    %1141 = vmatprep.subr.mxu0 0.0
    %1142 = vmatpush2.msra.mxu0 0.0
    %1143 = vmatprep.subr.mxu0 0.0
    %1144 = vmatpush2.msra.mxu0 0.0
    %1145 = vmatprep.subr.mxu0 0.0
    %1146 = vmatpush2.msra.mxu0 0.0
    %1147 = vmatprep.subr.mxu0 0.0
    %1148 = vmatpush2.msra.mxu0 0.0
    %1149 = vmatprep.subr.mxu0 0.0
    %1150 = vmatpush2.msra.mxu0 0.0
    %1151 = vmatprep.subr.mxu0 0.0
    %1152 = vmatpush2.msra.mxu0 0.0
    %1153 = vmatprep.subr.mxu0 0.0
    %1154 = vmatpush2.msra.mxu0 0.0
    %1155 = vmatprep.subr.mxu0 0.0
    %1156 = vmatpush2.msra.mxu0 0.0
    %1157 = vmatprep.subr.mxu0 0.0
    %1158 = vmatpush2.msra.mxu0 0.0
    %1159 = vmatprep.mubr.f32.mxu0 0.0
    %v1160 = vand.u32 %v1089, 4294901760
    %v1161 = vsub.f32 %v1089, %v1160
    %v1162 = vand.u32 %v1161, 4294901760
    %v1163 = vsub.f32 %v1161, %v1162
    %v1164 = vand.u32 %v1163, 4294901760
    %1165 = vmatmul.mubr.f32.gmra.mxu0 %v1164
    %v1166 = vpop.f32.mrf.mxu0
    %v1167 = vadd.f32 %v1085, %v1166
    %v1168 = vpop.f32.mrf.mxu0
    %1169 = vdwg.mxu0
    %1170 = vmatprep.subr.mxu0 0.0
    %1171 = vmatpush1.msra.mxu0 0.0
    %1172 = vmatprep.subr.mxu0 0.0
    %1173 = vmatpush1.msra.mxu0 0.0
    %1174 = vmatprep.subr.mxu0 0.0
    %1175 = vmatpush1.msra.mxu0 0.0
    %1176 = vmatprep.subr.mxu0 0.0
    %1177 = vmatpush1.msra.mxu0 0.0
    %1178 = vmatprep.subr.mxu0 0.0
    %1179 = vmatpush1.msra.mxu0 0.0
    %1180 = vmatprep.subr.mxu0 0.0
    %1181 = vmatpush1.msra.mxu0 0.0
    %1182 = vmatprep.subr.mxu0 0.0
    %1183 = vmatpush1.msra.mxu0 0.0
    %1184 = vmatprep.subr.mxu0 0.0
    %1185 = vmatpush1.msra.mxu0 0.0
    %1186 = vmatprep.subr.mxu0 0.0
    %1187 = vmatpush1.msra.mxu0 0.0
    %1188 = vmatprep.subr.mxu0 0.0
    %1189 = vmatpush1.msra.mxu0 0.0
    %1190 = vmatprep.subr.mxu0 0.0
    %1191 = vmatpush1.msra.mxu0 0.0
    %1192 = vmatprep.subr.mxu0 0.0
    %1193 = vmatpush1.msra.mxu0 0.0
    %1194 = vmatprep.subr.mxu0 0.0
    %v1195 = vand.u32 %v594, 4294901760
    %v1196 = vsub.f32 %v594, %v1195
    %v1197 = vand.u32 %v1196, 4294901760
    %v1198 = vsub.f32 %v1196, %v1197
    %v1199 = vand.u32 %v1198, 4294901760
    %1200 = vmatpush1.msra.mxu0 %v1199
    %1201 = vmatprep.subr.mxu0 0.0
    %v1202 = vand.u32 %v593, 4294901760
    %v1203 = vsub.f32 %v593, %v1202
    %v1204 = vand.u32 %v1203, 4294901760
    %v1205 = vsub.f32 %v1203, %v1204
    %v1206 = vand.u32 %v1205, 4294901760
    %1207 = vmatpush1.msra.mxu0 %v1206
    %1208 = vmatprep.subr.mxu0 0.0
    %v1209 = vand.u32 %v592, 4294901760
    %v1210 = vsub.f32 %v592, %v1209
    %v1211 = vand.u32 %v1210, 4294901760
    %v1212 = vsub.f32 %v1210, %v1211
    %v1213 = vand.u32 %v1212, 4294901760
    %1214 = vmatpush1.msra.mxu0 %v1213
    %1215 = vmatprep.subr.mxu0 0.0
    %v1216 = vand.u32 %v591, 4294901760
    %v1217 = vsub.f32 %v591, %v1216
    %v1218 = vand.u32 %v1217, 4294901760
    %v1219 = vsub.f32 %v1217, %v1218
    %v1220 = vand.u32 %v1219, 4294901760
    %1221 = vmatpush1.msra.mxu0 %v1220
    %1222 = vmatprep.subr.mxu0 0.0
    %1223 = vmatpush2.msra.mxu0 0.0
    %1224 = vmatprep.subr.mxu0 0.0
    %1225 = vmatpush2.msra.mxu0 0.0
    %1226 = vmatprep.subr.mxu0 0.0
    %1227 = vmatpush2.msra.mxu0 0.0
    %1228 = vmatprep.subr.mxu0 0.0
    %1229 = vmatpush2.msra.mxu0 0.0
    %1230 = vmatprep.subr.mxu0 0.0
    %1231 = vmatpush2.msra.mxu0 0.0
    %1232 = vmatprep.subr.mxu0 0.0
    %1233 = vmatpush2.msra.mxu0 0.0
    %1234 = vmatprep.subr.mxu0 0.0
    %1235 = vmatpush2.msra.mxu0 0.0
    %1236 = vmatprep.subr.mxu0 0.0
    %1237 = vmatpush2.msra.mxu0 0.0
    %1238 = vmatprep.subr.mxu0 0.0
    %1239 = vmatpush2.msra.mxu0 0.0
    %1240 = vmatprep.subr.mxu0 0.0
    %1241 = vmatpush2.msra.mxu0 0.0
    %1242 = vmatprep.subr.mxu0 0.0
    %1243 = vmatpush2.msra.mxu0 0.0
    %1244 = vmatprep.subr.mxu0 0.0
    %1245 = vmatpush2.msra.mxu0 0.0
    %1246 = vmatprep.subr.mxu0 0.0
    %1247 = vmatpush2.msra.mxu0 0.0
    %1248 = vmatprep.subr.mxu0 0.0
    %1249 = vmatpush2.msra.mxu0 0.0
    %1250 = vmatprep.subr.mxu0 0.0
    %1251 = vmatpush2.msra.mxu0 0.0
    %1252 = vmatprep.subr.mxu0 0.0
    %1253 = vmatpush2.msra.mxu0 0.0
    %1254 = vmatprep.mubr.f32.mxu0 0.0
    %v1255 = vand.u32 %v1089, 4294901760
    %1256 = vmatmul.mubr.f32.gmra.mxu0 %v1255
    %v1257 = vpop.f32.mrf.mxu0
    %v1258 = vadd.f32 %v1167, %v1257
    %v1259 = vpop.f32.mrf.mxu0
    %1260 = vdwg.mxu0
    %1261 = vmatprep.subr.mxu0 0.0
    %1262 = vmatpush1.msra.mxu0 0.0
    %1263 = vmatprep.subr.mxu0 0.0
    %1264 = vmatpush1.msra.mxu0 0.0
    %1265 = vmatprep.subr.mxu0 0.0
    %1266 = vmatpush1.msra.mxu0 0.0
    %1267 = vmatprep.subr.mxu0 0.0
    %1268 = vmatpush1.msra.mxu0 0.0
    %1269 = vmatprep.subr.mxu0 0.0
    %1270 = vmatpush1.msra.mxu0 0.0
    %1271 = vmatprep.subr.mxu0 0.0
    %1272 = vmatpush1.msra.mxu0 0.0
    %1273 = vmatprep.subr.mxu0 0.0
    %1274 = vmatpush1.msra.mxu0 0.0
    %1275 = vmatprep.subr.mxu0 0.0
    %1276 = vmatpush1.msra.mxu0 0.0
    %1277 = vmatprep.subr.mxu0 0.0
    %1278 = vmatpush1.msra.mxu0 0.0
    %1279 = vmatprep.subr.mxu0 0.0
    %1280 = vmatpush1.msra.mxu0 0.0
    %1281 = vmatprep.subr.mxu0 0.0
    %1282 = vmatpush1.msra.mxu0 0.0
    %1283 = vmatprep.subr.mxu0 0.0
    %1284 = vmatpush1.msra.mxu0 0.0
    %1285 = vmatprep.subr.mxu0 0.0
    %v1286 = vand.u32 %v594, 4294901760
    %v1287 = vsub.f32 %v594, %v1286
    %1288 = vmatpush1.msra.mxu0 %v1287
    %1289 = vmatprep.subr.mxu0 0.0
    %v1290 = vand.u32 %v593, 4294901760
    %v1291 = vsub.f32 %v593, %v1290
    %1292 = vmatpush1.msra.mxu0 %v1291
    %1293 = vmatprep.subr.mxu0 0.0
    %v1294 = vand.u32 %v592, 4294901760
    %v1295 = vsub.f32 %v592, %v1294
    %1296 = vmatpush1.msra.mxu0 %v1295
    %1297 = vmatprep.subr.mxu0 0.0
    %v1298 = vand.u32 %v591, 4294901760
    %v1299 = vsub.f32 %v591, %v1298
    %1300 = vmatpush1.msra.mxu0 %v1299
    %1301 = vmatprep.subr.mxu0 0.0
    %1302 = vmatpush2.msra.mxu0 0.0
    %1303 = vmatprep.subr.mxu0 0.0
    %1304 = vmatpush2.msra.mxu0 0.0
    %1305 = vmatprep.subr.mxu0 0.0
    %1306 = vmatpush2.msra.mxu0 0.0
    %1307 = vmatprep.subr.mxu0 0.0
    %1308 = vmatpush2.msra.mxu0 0.0
    %1309 = vmatprep.subr.mxu0 0.0
    %1310 = vmatpush2.msra.mxu0 0.0
    %1311 = vmatprep.subr.mxu0 0.0
    %1312 = vmatpush2.msra.mxu0 0.0
    %1313 = vmatprep.subr.mxu0 0.0
    %1314 = vmatpush2.msra.mxu0 0.0
    %1315 = vmatprep.subr.mxu0 0.0
    %1316 = vmatpush2.msra.mxu0 0.0
    %1317 = vmatprep.subr.mxu0 0.0
    %1318 = vmatpush2.msra.mxu0 0.0
    %1319 = vmatprep.subr.mxu0 0.0
    %1320 = vmatpush2.msra.mxu0 0.0
    %1321 = vmatprep.subr.mxu0 0.0
    %1322 = vmatpush2.msra.mxu0 0.0
    %1323 = vmatprep.subr.mxu0 0.0
    %1324 = vmatpush2.msra.mxu0 0.0
    %1325 = vmatprep.subr.mxu0 0.0
    %1326 = vmatpush2.msra.mxu0 0.0
    %1327 = vmatprep.subr.mxu0 0.0
    %1328 = vmatpush2.msra.mxu0 0.0
    %1329 = vmatprep.subr.mxu0 0.0
    %1330 = vmatpush2.msra.mxu0 0.0
    %1331 = vmatprep.subr.mxu0 0.0
    %1332 = vmatpush2.msra.mxu0 0.0
    %1333 = vmatprep.mubr.f32.mxu0 0.0
    %v1334 = vand.u32 %v1089, 4294901760
    %v1335 = vsub.f32 %v1089, %v1334
    %1336 = vmatmul.mubr.f32.gmra.mxu0 %v1335
    %v1337 = vpop.f32.mrf.mxu0
    %v1338 = vadd.f32 %v1258, %v1337
    %v1339 = vpop.f32.mrf.mxu0
    %1340 = vdwg.mxu0
    %1341 = vmatprep.subr.mxu0 0.0
    %1342 = vmatpush1.msra.mxu0 0.0
    %1343 = vmatprep.subr.mxu0 0.0
    %1344 = vmatpush1.msra.mxu0 0.0
    %1345 = vmatprep.subr.mxu0 0.0
    %1346 = vmatpush1.msra.mxu0 0.0
    %1347 = vmatprep.subr.mxu0 0.0
    %1348 = vmatpush1.msra.mxu0 0.0
    %1349 = vmatprep.subr.mxu0 0.0
    %1350 = vmatpush1.msra.mxu0 0.0
    %1351 = vmatprep.subr.mxu0 0.0
    %1352 = vmatpush1.msra.mxu0 0.0
    %1353 = vmatprep.subr.mxu0 0.0
    %1354 = vmatpush1.msra.mxu0 0.0
    %1355 = vmatprep.subr.mxu0 0.0
    %1356 = vmatpush1.msra.mxu0 0.0
    %1357 = vmatprep.subr.mxu0 0.0
    %1358 = vmatpush1.msra.mxu0 0.0
    %1359 = vmatprep.subr.mxu0 0.0
    %1360 = vmatpush1.msra.mxu0 0.0
    %1361 = vmatprep.subr.mxu0 0.0
    %1362 = vmatpush1.msra.mxu0 0.0
    %1363 = vmatprep.subr.mxu0 0.0
    %1364 = vmatpush1.msra.mxu0 0.0
    %1365 = vmatprep.subr.mxu0 0.0
    %v1366 = vand.u32 %v594, 4294901760
    %1367 = vmatpush1.msra.mxu0 %v1366
    %1368 = vmatprep.subr.mxu0 0.0
    %v1369 = vand.u32 %v593, 4294901760
    %1370 = vmatpush1.msra.mxu0 %v1369
    %1371 = vmatprep.subr.mxu0 0.0
    %v1372 = vand.u32 %v592, 4294901760
    %1373 = vmatpush1.msra.mxu0 %v1372
    %1374 = vmatprep.subr.mxu0 0.0
    %v1375 = vand.u32 %v591, 4294901760
    %1376 = vmatpush1.msra.mxu0 %v1375
    %1377 = vmatprep.subr.mxu0 0.0
    %1378 = vmatpush2.msra.mxu0 0.0
    %1379 = vmatprep.subr.mxu0 0.0
    %1380 = vmatpush2.msra.mxu0 0.0
    %1381 = vmatprep.subr.mxu0 0.0
    %1382 = vmatpush2.msra.mxu0 0.0
    %1383 = vmatprep.subr.mxu0 0.0
    %1384 = vmatpush2.msra.mxu0 0.0
    %1385 = vmatprep.subr.mxu0 0.0
    %1386 = vmatpush2.msra.mxu0 0.0
    %1387 = vmatprep.subr.mxu0 0.0
    %1388 = vmatpush2.msra.mxu0 0.0
    %1389 = vmatprep.subr.mxu0 0.0
    %1390 = vmatpush2.msra.mxu0 0.0
    %1391 = vmatprep.subr.mxu0 0.0
    %1392 = vmatpush2.msra.mxu0 0.0
    %1393 = vmatprep.subr.mxu0 0.0
    %1394 = vmatpush2.msra.mxu0 0.0
    %1395 = vmatprep.subr.mxu0 0.0
    %1396 = vmatpush2.msra.mxu0 0.0
    %1397 = vmatprep.subr.mxu0 0.0
    %1398 = vmatpush2.msra.mxu0 0.0
    %1399 = vmatprep.subr.mxu0 0.0
    %1400 = vmatpush2.msra.mxu0 0.0
    %1401 = vmatprep.subr.mxu0 0.0
    %1402 = vmatpush2.msra.mxu0 0.0
    %1403 = vmatprep.subr.mxu0 0.0
    %1404 = vmatpush2.msra.mxu0 0.0
    %1405 = vmatprep.subr.mxu0 0.0
    %1406 = vmatpush2.msra.mxu0 0.0
    %1407 = vmatprep.subr.mxu0 0.0
    %1408 = vmatpush2.msra.mxu0 0.0
    %1409 = vmatprep.mubr.f32.mxu0 0.0
    %v1410 = vand.u32 %v1089, 4294901760
    %v1411 = vsub.f32 %v1089, %v1410
    %v1412 = vand.u32 %v1411, 4294901760
    %1413 = vmatmul.mubr.f32.gmra.mxu0 %v1412
    %v1414 = vpop.f32.mrf.mxu0
    %v1415 = vadd.f32 %v1338, %v1414
    %v1416 = vpop.f32.mrf.mxu0
    %1417 = vdwg.mxu0
    %1418 = vmatprep.subr.mxu0 0.0
    %1419 = vmatpush1.msra.mxu0 0.0
    %1420 = vmatprep.subr.mxu0 0.0
    %1421 = vmatpush1.msra.mxu0 0.0
    %1422 = vmatprep.subr.mxu0 0.0
    %1423 = vmatpush1.msra.mxu0 0.0
    %1424 = vmatprep.subr.mxu0 0.0
    %1425 = vmatpush1.msra.mxu0 0.0
    %1426 = vmatprep.subr.mxu0 0.0
    %1427 = vmatpush1.msra.mxu0 0.0
    %1428 = vmatprep.subr.mxu0 0.0
    %1429 = vmatpush1.msra.mxu0 0.0
    %1430 = vmatprep.subr.mxu0 0.0
    %1431 = vmatpush1.msra.mxu0 0.0
    %1432 = vmatprep.subr.mxu0 0.0
    %1433 = vmatpush1.msra.mxu0 0.0
    %1434 = vmatprep.subr.mxu0 0.0
    %1435 = vmatpush1.msra.mxu0 0.0
    %1436 = vmatprep.subr.mxu0 0.0
    %1437 = vmatpush1.msra.mxu0 0.0
    %1438 = vmatprep.subr.mxu0 0.0
    %1439 = vmatpush1.msra.mxu0 0.0
    %1440 = vmatprep.subr.mxu0 0.0
    %1441 = vmatpush1.msra.mxu0 0.0
    %1442 = vmatprep.subr.mxu0 0.0
    %v1443 = vand.u32 %v594, 4294901760
    %v1444 = vsub.f32 %v594, %v1443
    %v1445 = vand.u32 %v1444, 4294901760
    %1446 = vmatpush1.msra.mxu0 %v1445
    %1447 = vmatprep.subr.mxu0 0.0
    %v1448 = vand.u32 %v593, 4294901760
    %v1449 = vsub.f32 %v593, %v1448
    %v1450 = vand.u32 %v1449, 4294901760
    %1451 = vmatpush1.msra.mxu0 %v1450
    %1452 = vmatprep.subr.mxu0 0.0
    %v1453 = vand.u32 %v592, 4294901760
    %v1454 = vsub.f32 %v592, %v1453
    %v1455 = vand.u32 %v1454, 4294901760
    %1456 = vmatpush1.msra.mxu0 %v1455
    %1457 = vmatprep.subr.mxu0 0.0
    %v1458 = vand.u32 %v591, 4294901760
    %v1459 = vsub.f32 %v591, %v1458
    %v1460 = vand.u32 %v1459, 4294901760
    %1461 = vmatpush1.msra.mxu0 %v1460
    %1462 = vmatprep.subr.mxu0 0.0
    %1463 = vmatpush2.msra.mxu0 0.0
    %1464 = vmatprep.subr.mxu0 0.0
    %1465 = vmatpush2.msra.mxu0 0.0
    %1466 = vmatprep.subr.mxu0 0.0
    %1467 = vmatpush2.msra.mxu0 0.0
    %1468 = vmatprep.subr.mxu0 0.0
    %1469 = vmatpush2.msra.mxu0 0.0
    %1470 = vmatprep.subr.mxu0 0.0
    %1471 = vmatpush2.msra.mxu0 0.0
    %1472 = vmatprep.subr.mxu0 0.0
    %1473 = vmatpush2.msra.mxu0 0.0
    %1474 = vmatprep.subr.mxu0 0.0
    %1475 = vmatpush2.msra.mxu0 0.0
    %1476 = vmatprep.subr.mxu0 0.0
    %1477 = vmatpush2.msra.mxu0 0.0
    %1478 = vmatprep.subr.mxu0 0.0
    %1479 = vmatpush2.msra.mxu0 0.0
    %1480 = vmatprep.subr.mxu0 0.0
    %1481 = vmatpush2.msra.mxu0 0.0
    %1482 = vmatprep.subr.mxu0 0.0
    %1483 = vmatpush2.msra.mxu0 0.0
    %1484 = vmatprep.subr.mxu0 0.0
    %1485 = vmatpush2.msra.mxu0 0.0
    %1486 = vmatprep.subr.mxu0 0.0
    %1487 = vmatpush2.msra.mxu0 0.0
    %1488 = vmatprep.subr.mxu0 0.0
    %1489 = vmatpush2.msra.mxu0 0.0
    %1490 = vmatprep.subr.mxu0 0.0
    %1491 = vmatpush2.msra.mxu0 0.0
    %1492 = vmatprep.subr.mxu0 0.0
    %1493 = vmatpush2.msra.mxu0 0.0
    %1494 = vmatprep.mubr.f32.mxu0 0.0
    %v1495 = vand.u32 %v1089, 4294901760
    %1496 = vmatmul.mubr.f32.gmra.mxu0 %v1495
    %v1497 = vpop.f32.mrf.mxu0
    %v1498 = vadd.f32 %v1415, %v1497
    %v1499 = vpop.f32.mrf.mxu0
    %1500 = vdwg.mxu0
    %1501 = vmatprep.subr.mxu0 0.0
    %1502 = vmatpush1.msra.mxu0 0.0
    %1503 = vmatprep.subr.mxu0 0.0
    %1504 = vmatpush1.msra.mxu0 0.0
    %1505 = vmatprep.subr.mxu0 0.0
    %1506 = vmatpush1.msra.mxu0 0.0
    %1507 = vmatprep.subr.mxu0 0.0
    %1508 = vmatpush1.msra.mxu0 0.0
    %1509 = vmatprep.subr.mxu0 0.0
    %1510 = vmatpush1.msra.mxu0 0.0
    %1511 = vmatprep.subr.mxu0 0.0
    %1512 = vmatpush1.msra.mxu0 0.0
    %1513 = vmatprep.subr.mxu0 0.0
    %1514 = vmatpush1.msra.mxu0 0.0
    %1515 = vmatprep.subr.mxu0 0.0
    %1516 = vmatpush1.msra.mxu0 0.0
    %1517 = vmatprep.subr.mxu0 0.0
    %1518 = vmatpush1.msra.mxu0 0.0
    %1519 = vmatprep.subr.mxu0 0.0
    %1520 = vmatpush1.msra.mxu0 0.0
    %1521 = vmatprep.subr.mxu0 0.0
    %1522 = vmatpush1.msra.mxu0 0.0
    %1523 = vmatprep.subr.mxu0 0.0
    %1524 = vmatpush1.msra.mxu0 0.0
    %1525 = vmatprep.subr.mxu0 0.0
    %v1526 = vand.u32 %v594, 4294901760
    %1527 = vmatpush1.msra.mxu0 %v1526
    %1528 = vmatprep.subr.mxu0 0.0
    %v1529 = vand.u32 %v593, 4294901760
    %1530 = vmatpush1.msra.mxu0 %v1529
    %1531 = vmatprep.subr.mxu0 0.0
    %v1532 = vand.u32 %v592, 4294901760
    %1533 = vmatpush1.msra.mxu0 %v1532
    %1534 = vmatprep.subr.mxu0 0.0
    %v1535 = vand.u32 %v591, 4294901760
    %1536 = vmatpush1.msra.mxu0 %v1535
    %1537 = vmatprep.subr.mxu0 0.0
    %1538 = vmatpush2.msra.mxu0 0.0
    %1539 = vmatprep.subr.mxu0 0.0
    %1540 = vmatpush2.msra.mxu0 0.0
    %1541 = vmatprep.subr.mxu0 0.0
    %1542 = vmatpush2.msra.mxu0 0.0
    %1543 = vmatprep.subr.mxu0 0.0
    %1544 = vmatpush2.msra.mxu0 0.0
    %1545 = vmatprep.subr.mxu0 0.0
    %1546 = vmatpush2.msra.mxu0 0.0
    %1547 = vmatprep.subr.mxu0 0.0
    %1548 = vmatpush2.msra.mxu0 0.0
    %1549 = vmatprep.subr.mxu0 0.0
    %1550 = vmatpush2.msra.mxu0 0.0
    %1551 = vmatprep.subr.mxu0 0.0
    %1552 = vmatpush2.msra.mxu0 0.0
    %1553 = vmatprep.subr.mxu0 0.0
    %1554 = vmatpush2.msra.mxu0 0.0
    %1555 = vmatprep.subr.mxu0 0.0
    %1556 = vmatpush2.msra.mxu0 0.0
    %1557 = vmatprep.subr.mxu0 0.0
    %1558 = vmatpush2.msra.mxu0 0.0
    %1559 = vmatprep.subr.mxu0 0.0
    %1560 = vmatpush2.msra.mxu0 0.0
    %1561 = vmatprep.subr.mxu0 0.0
    %1562 = vmatpush2.msra.mxu0 0.0
    %1563 = vmatprep.subr.mxu0 0.0
    %1564 = vmatpush2.msra.mxu0 0.0
    %1565 = vmatprep.subr.mxu0 0.0
    %1566 = vmatpush2.msra.mxu0 0.0
    %1567 = vmatprep.subr.mxu0 0.0
    %1568 = vmatpush2.msra.mxu0 0.0
    %1569 = vmatprep.mubr.f32.mxu0 0.0
    %v1570 = vand.u32 %v1089, 4294901760
    %1571 = vmatmul.mubr.f32.gmra.mxu0 %v1570
    %v1572 = vpop.f32.mrf.mxu0
    %v1573 = vadd.f32 %v1498, %v1572
    %v1574 = vpop.f32.mrf.mxu0
    %1575 = vdwg.mxu0
    %v1576 = vld [vmem:[%s7] sm:$0x1]
    %v1578 = vlaneseq
    %v1579 = vshrl.u32 %v1578, 7
    %v1580 = vsub.s32 0, %v1579
    %v1581 = vrot.slane %v1576, %v1580
    %v1583 = vadd.f32 %v1573, %v1581
    %v1586 = vunpack.c.l.s4 1966171168
    %v1587 = vunpack.c.0.s8 %v1586
    %v1588 = vlaneseq
    %v1589 = vshrl.u32 %v1588, 7
    %v1590 = vsub.s32 %v1587, %v1589
    %v1591 = vrot.slane %v1583, %v1590
    %v1592 = vcombine.high %v1591, %v1591
    %v1594 = vunpack.c.l.s4 1966171168
    %v1595 = vunpack.c.0.s8 %v1594
    %v1596 = vlaneseq
    %v1597 = vshrl.u32 %v1596, 7
    %v1598 = vsub.s32 %v1595, %v1597
    %v1599 = vrot.slane %v1591, %v1598
    %v1601 = vunpack.c.l.s4 1966171168
    %v1602 = vunpack.c.0.s8 %v1601
    %v1603 = vlaneseq
    %v1604 = vshrl.u32 %v1603, 7
    %v1605 = vsub.s32 %v1602, %v1604
    %v1606 = vrot.slane %v1592, %v1605
    %v1607 = vlaneseq
    %v1608 = vshrl.u32 %v1607, 7
    %v1609 = vsub.s32 0, %v1608
    %v1610 = vrot.slane %v1599, %v1609
    %v1611 = vlaneseq
    %v1612 = vshrl.u32 %v1611, 7
    %v1613 = vsub.s32 0, %v1612
    %v1614 = vrot.slane %v1606, %v1613
    %v1617 = vmul.f32 %v33, %v1610
    %v1618 = vmul.f32 %v34, %v1614
    %v1619 = vsel %vm599, %v1617, 0.0
    %1620 = vadd.xlane.f32.xlu0 %v1619
    %v1621 = vpop.xlane.xlu0 %1620
    %v1622 = vsel %vm599, %v1618, 0.0
    %1623 = vadd.xlane.f32.xlu0 %v1622
    %v1624 = vpop.xlane.xlu0 %1623
    %v1627 = vlaneseq
    %v1628 = vand.u32 %v1627, 127
    %v1629 = vlaneseq
    %v1630 = vshrl.u32 %v1629, 7
    %v1631 = vsub.s32 %v1628, %v1630
    %v1632 = vrot.slane %v1621, %v1631
    %v1633 = vlaneseq
    %v1634 = vshrl.u32 %v1633, 7
    %v1635 = vsub.s32 %v1628, %v1634
    %v1636 = vrot.slane %v1624, %v1635
    %vm1637 = vcmask 1041409
    %v1638 = vsel %vm1637, %v1636, %v1632
    %vm1640 = vcmask 58368
    %v1641 = vsel %vm1640, %v1638, -inf
    %1642 = vmax.xlane.f32.xlu0 %v1641
    %v1643 = vpop.xlane.xlu0 %1642
    %v1645 = vlaneseq
    %v1646 = vshrl.u32 %v1645, 7
    %v1647 = vsub.s32 0, %v1646
    %v1648 = vrot.slane %v1643, %v1647
    %v1649 = vlaneseq
    %v1650 = vshrl.u32 %v1649, 7
    %v1651 = vsub.s32 1, %v1650
    %v1652 = vrot.slane %v1643, %v1651
    %v1655 = vsub.f32 %v1621, %v1648
    %v1656 = vsub.f32 %v1624, %v1652
    %v1657 = vmul.f32 %v1655, 1.442695
    %v1658 = vpow.pop %v1657
    %v1659 = vmul.f32 %v1656, 1.442695
    %v1660 = vpow.pop %v1659
    %1663 = vset.pattern.permute.xlu0 0
    %1664 = vperm.xlu0 %1663, %v1658
    %v1665 = vpop.permute.xlu0 %1664
    %1666 = vset.pattern.permute.xlu0 0
    %1667 = vperm.xlu0 %1666, %v1660
    %v1668 = vpop.permute.xlu0 %1667
    %v1669 = vlaneseq
    %v1670 = vshrl.u32 %v1669, 7
    %v1671 = vsub.s32 %v1628, %v1670
    %v1672 = vrot.slane %v1665, %v1671
    %v1673 = vlaneseq
    %v1674 = vshrl.u32 %v1673, 7
    %v1675 = vsub.s32 %v1628, %v1674
    %v1676 = vrot.slane %v1668, %v1675
    %v1677 = vsel %vm1637, %v1676, %v1672
    %v1679 = vsel %vm1640, %v1677, 0.0
    %1680 = vadd.xlane.f32.xlu0 %v1679
    %v1681 = vpop.xlane.xlu0 %1680
    %v1683 = vlaneseq
    %v1684 = vshrl.u32 %v1683, 7
    %v1685 = vsub.s32 0, %v1684
    %v1686 = vrot.slane %v1681, %v1685
    %v1687 = vlaneseq
    %v1688 = vshrl.u32 %v1687, 7
    %v1689 = vsub.s32 1, %v1688
    %v1690 = vrot.slane %v1681, %v1689
    %v1693 = vrcp.pop %v1686
    %v1694 = vmul.f32 %v1658, %v1693
    %v1695 = vrcp.pop %v1690
    %v1696 = vmul.f32 %v1660, %v1695
    %1698 = vset.pattern.permute.xlu0 0
    %1699 = vperm.xlu0 %1698, %v1694
    %v1700 = vpop.permute.xlu0 %1699
    %1703 = vset.pattern.permute.xlu0 0
    %1704 = vperm.xlu0 %1703, %v1696
    %v1705 = vpop.permute.xlu0 %1704
    %v1707 = vmul.f32 %v1700, %v33
    %v1708 = vmul.f32 %v1705, %v34
    %v1709 = vsel %vm599, %v1707, 0.0
    %v1710 = vrot.slane %v1709, 4
    %v1711 = vadd.f32 %v1709, %v1710
    %v1712 = vrot.slane %v1711, 2
    %v1713 = vadd.f32 %v1711, %v1712
    %v1714 = vrot.slane %v1713, 1
    %v1715 = vadd.f32 %v1713, %v1714
    %v1716 = vsel %vm599, %v1708, 0.0
    %v1717 = vrot.slane %v1716, 4
    %v1718 = vadd.f32 %v1716, %v1717
    %v1719 = vrot.slane %v1718, 2
    %v1720 = vadd.f32 %v1718, %v1719
    %v1721 = vrot.slane %v1720, 1
    %v1722 = vadd.f32 %v1720, %v1721
    %v1724 = vrot.slane %v32, 1
    %v1727 = vmul.f32 %v1715, %v32
    %v1728 = vmul.f32 %v1722, %v1724
    %v1731 = vrot.slane %v1728, 7
    %v1732 = vsel %vm1637, %v1731, %v1727
    %vm1734 = vcmask 254976
    %1735 = vst.msk [vmem:[#allocation2] sm:$0x3] %vm1734, %v1732
    // Predicated region
    $region34: #{tpu_custom_call.1} parent=1 // pred_check
      _
    $region35: #{tpu_custom_call.1} parent=1 // pred_check_branch
      %1737 = sbr.rel (0) target = $region37
    $region36: #{tpu_custom_call.1} parent=1 // pred_region
      %s1739 = ssub.s32 32, 32
      %1740 = vsyncadd [#allocation3], %s1739
      %s1742 = sshll.u32 [#allocation2], 4
      %s1743 = int_to_ptr.vmem [resolvable:$true] %s1742
      %1745 = dma.vmem_to_hbm [thread:$0]  %s1743, 32, %s8, [#allocation3]
    $region37: #{tpu_custom_call.1} parent=1 // pred_fallthru
      _
    // Predicated region
    $region38: #{tpu_custom_call.1} parent=1 // pred_check
      _
    $region39: #{tpu_custom_call.1} parent=1 // pred_check_branch
      %1747 = sbr.rel (0) target = $region41
    $region40: #{tpu_custom_call.1} parent=1 // pred_region
      %1748 = dma.done [#allocation3], 32
    $region41: #{tpu_custom_call.1} parent=1 // pred_fallthru
      _
    %1749 = vsyncpa [#allocation3], 1

</llo_original>
